<compile_context>
chip_gen: v6e
topology: v6e:2x2x1
jax: 0.10.0
libtpu: 0.0.40
codegen_flags: <defaults>
</compile_context>

<pallas_src>
import jax
import jax.numpy as jnp
from jax import lax
from jax.experimental import pallas as pl
from jax.experimental.pallas import tpu as pltpu


NEG_INF = -1e30


def _round_up(x, m):
    return ((x + m - 1) // m) * m


def _pad_cols(x, n, value=0.0):
    return jnp.pad(x, ((0, 0), (0, n - x.shape[1])), constant_values=value)


def attn_decoder_kernel(
    hid0_ref,        # (1, H)     initial hidden state
    emb_attn_ref,    # (T, 1, LP) E[tok] @ wa_e           (pad lanes 0)
    emb_x_ref,       # (T, 1, NX) E[tok] @ (wc_e@W_i) + (bc@W_i + b_i)  (pad lanes 0)
    w_h_ref,         # (H, NH)    [wa_h | w_hr | w_hz | w_hn]  (lane padded)
    b_h_ref,         # (1, NH)    [ba (pad -1e30) | b_hr | b_hz | b_hn]
    enc_proj2_ref,   # (LP, NX)   (enc @ wc_c) @ W_i       (zero padded)
    h_seq_ref,       # out (T, 1, H)  per-step GRU hidden states
    attnw_ref,       # out (T, 1, LP) per-step attention weights
):
    T = emb_attn_ref.shape[0]
    LP = attnw_ref.shape[-1]
    H = hid0_ref.shape[-1]

    # Weights loaded once, stay in vregs/VMEM for the whole decode.
    w_h = w_h_ref[...]
    b_h = b_h_ref[...]
    enc_proj2 = enc_proj2_ref[...]

    def step(t, hid):
        # Fused hidden projection: attention-score part + GRU hh gates.
        hid_proj = jnp.dot(hid, w_h, preferred_element_type=jnp.float32) + b_h   # (1, NH)

        # Attention softmax over LP lanes (pad lanes at -1e30 via b_h -> exp()=0).
        scores = emb_attn_ref[t] + hid_proj[:, :LP]                              # (1, LP)
        scores = scores - jnp.max(scores, axis=1, keepdims=True)
        e = jnp.exp(scores)
        attn_w = e / jnp.sum(e, axis=1, keepdims=True)                           # (1, LP)
        attnw_ref[t] = attn_w

        # GRU input gates with attn_combine and W_i folded in:
        #   [i_r|i_z|i_n] = emb@(wc_e@W_i) + attn_w@((enc@wc_c)@W_i) + (bc@W_i + b_i)
        x_proj = emb_x_ref[t] + jnp.dot(
            attn_w, enc_proj2, preferred_element_type=jnp.float32)               # (1, NX)

        i_r = x_proj[:, 0 * H:1 * H]
        i_z = x_proj[:, 1 * H:2 * H]
        i_n = x_proj[:, 2 * H:3 * H]
        h_r = hid_proj[:, LP + 0 * H:LP + 1 * H]
        h_z = hid_proj[:, LP + 1 * H:LP + 2 * H]
        h_n = hid_proj[:, LP + 2 * H:LP + 3 * H]

        r = jax.nn.sigmoid(i_r + h_r)
        z = jax.nn.sigmoid(i_z + h_z)
        n = jnp.tanh(i_n + r * h_n)
        h_new = (1.0 - z) * n + z * hid                                          # (1, H)
        h_seq_ref[t] = h_new
        return h_new

    # Whole decode loop in-kernel; fully unrolled (T is small and static) so the
    # scheduler can overlap step t's tail with step t+1's hid matmul.
    lax.fori_loop(0, T, step, hid0_ref[...], unroll=True)


def init_params(key, hidden_size, vocab_size, max_length=100):
    """Deterministic synthetic parameters (shapes match the PyTorch module, with
    Linear weights pre-transposed to (in, out) and concat-weights pre-split)."""
    H, V, L = hidden_size, vocab_size, max_length
    names_shapes = [
        ("embedding", (V, H)),
        ("wa_e", (H, L)), ("wa_h", (H, L)), ("ba", (1, L)),          # attn Linear(2H -> L)
        ("wc_e", (H, H)), ("wc_c", (H, H)), ("bc", (1, H)),          # attn_combine Linear(2H -> H)
        ("w_ir", (H, H)), ("w_iz", (H, H)), ("w_in", (H, H)),        # GRU weight_ih per gate
        ("b_ir", (1, H)), ("b_iz", (1, H)), ("b_in", (1, H)),
        ("w_hr", (H, H)), ("w_hz", (H, H)), ("w_hn", (H, H)),        # GRU weight_hh per gate
        ("b_hr", (1, H)), ("b_hz", (1, H)), ("b_hn", (1, H)),
        ("out_w", (H, V)), ("out_b", (1, V)),                        # out Linear(H -> V)
    ]
    keys = jax.random.split(key, len(names_shapes))
    return {name: (0.1 * jax.random.normal(k, shape, dtype=jnp.float32))
            for (name, shape), k in zip(names_shapes, keys)}


@jax.jit
def attn_decoder_forward(params, tokens, hidden, encoder_outputs):
    """Runs T decode steps of AttnDecoderRNN.forward (eval mode).
    tokens: (T,) int32, hidden: (1,1,H), encoder_outputs: (L,H).
    Returns (log_probs (T,V), final hidden (1,1,H), attn_weights (T,L))."""
    H = hidden.shape[-1]
    L = encoder_outputs.shape[0]
    T = tokens.shape[0]

    LP = _round_up(L, 128)            # attention / softmax lane width
    NX = _round_up(3 * H, 128)        # fused GRU-input-gate width
    NH = _round_up(LP + 3 * H, 128)   # fused hidden-projection width

    # --- one-time algebraic fusion (all outside the recurrence) ---
    # Fold GRU input weights through attn_combine:
    #   x @ W_i = emb @ (wc_e@W_i) + attn_w @ ((enc@wc_c)@W_i) + (bc@W_i + b_i)
    w_i = jnp.concatenate([params["w_ir"], params["w_iz"], params["w_in"]], axis=1)   # (H, 3H)
    b_i = jnp.concatenate([params["b_ir"], params["b_iz"], params["b_in"]], axis=1)   # (1, 3H)
    wce_x = params["wc_e"] @ w_i                                                       # (H, 3H)
    b_fold = params["bc"] @ w_i + b_i                                                  # (1, 3H)
    enc_proj2 = (encoder_outputs @ params["wc_c"]) @ w_i                               # (L, 3H)
    enc_proj2 = jnp.pad(enc_proj2, ((0, LP - L), (0, NX - 3 * H)))                     # (LP, NX)

    # Token-side projections precomputed once (tokens known at launch); dropout = identity (eval).
    emb_all = params["embedding"][tokens.astype(jnp.int32)]                            # (T, H)
    emb_attn = _pad_cols(emb_all @ params["wa_e"], LP)[:, None, :]                     # (T, 1, LP)
    emb_x = _pad_cols(emb_all @ wce_x + b_fold, NX)[:, None, :]                        # (T, 1, NX)

    # Fused per-step hidden projection: attention scores + GRU hh gates.
    w_h = _pad_cols(jnp.concatenate(
        [_pad_cols(params["wa_h"], LP),
         params["w_hr"], params["w_hz"], params["w_hn"]], axis=1), NH)                 # (H, NH)
    b_h = _pad_cols(jnp.concatenate(
        [_pad_cols(params["ba"], LP, NEG_INF),
         params["b_hr"], params["b_hz"], params["b_hn"]], axis=1), NH)                 # (1, NH)

    hid0 = hidden.reshape(1, H)

    vmem_spec = pl.BlockSpec(memory_space=pltpu.MemorySpace.VMEM)

    h_seq, attn_pad = pl.pallas_call(
        attn_decoder_kernel,
        out_shape=(
            jax.ShapeDtypeStruct((T, 1, H), jnp.float32),    # per-step hidden states
            jax.ShapeDtypeStruct((T, 1, LP), jnp.float32),   # per-step attention weights
        ),
        in_specs=[vmem_spec] * 6,
        out_specs=(vmem_spec, vmem_spec),
    )(hid0, emb_attn, emb_x, w_h, b_h, enc_proj2)

    # Output head off the recurrence: one M=T matmul + log_softmax (per review,
    # done as a plain XLA op in the wrapper).
    h_all = h_seq[:, 0, :]                                                             # (T, H)
    logits = h_all @ params["out_w"] + params["out_b"]                                 # (T, V)
    logp = jax.nn.log_softmax(logits, axis=1)
    new_hidden = h_all[T - 1].reshape(1, 1, H)
    attn_w = attn_pad[:, 0, :L]                                                        # (T, L)
    return logp, new_hidden, attn_w


def reference_forward(params, tokens, hidden, encoder_outputs):
    """Pure-JAX reference reproducing the PyTorch forward (eval mode), looped over T steps."""
    H = hidden.shape[-1]
    hid = hidden.reshape(1, H)
    logps, attns = [], []
    for t in range(tokens.shape[0]):
        emb = params["embedding"][tokens[t]].reshape(1, H)
        scores = emb @ params["wa_e"] + hid @ params["wa_h"] + params["ba"]
        attn_w = jax.nn.softmax(scores, axis=1)
        context = attn_w @ encoder_outputs
        x = emb @ params["wc_e"] + context @ params["wc_c"] + params["bc"]
        r = jax.nn.sigmoid(x @ params["w_ir"] + params["b_ir"]
                           + hid @ params["w_hr"] + params["b_hr"])
        z = jax.nn.sigmoid(x @ params["w_iz"] + params["b_iz"]
                           + hid @ params["w_hz"] + params["b_hz"])
        n = jnp.tanh(x @ params["w_in"] + params["b_in"]
                     + r * (hid @ params["w_hn"] + params["b_hn"]))
        hid = (1.0 - z) * n + z * hid
        logits = hid @ params["out_w"] + params["out_b"]
        logps.append(jax.nn.log_softmax(logits, axis=1))
        attns.append(attn_w)
    return jnp.concatenate(logps, axis=0), hid.reshape(1, 1, H), jnp.concatenate(attns, axis=0)


if __name__ == "__main__":
    HIDDEN = 32
    VOCAB = 48
    MAX_LEN = 100      # attn layer maps 2H -> 100, as in the module
    T = 8              # decode steps run inside one kernel call

    root = jax.random.PRNGKey(0)
    k_params, k_hid, k_enc, k_tok = jax.random.split(root, 4)

    params = init_params(k_params, HIDDEN, VOCAB, MAX_LEN)
    tokens = jax.random.randint(k_tok, (T,), 0, VOCAB, dtype=jnp.int32)
    hidden = jax.random.normal(k_hid, (1, 1, HIDDEN), dtype=jnp.float32)
    encoder_outputs = jax.random.normal(k_enc, (MAX_LEN, HIDDEN), dtype=jnp.float32)

    logp, new_hidden, attn_w = attn_decoder_forward(params, tokens, hidden, encoder_outputs)
    jax.block_until_ready((logp, new_hidden, attn_w))

    # correctness check against pure-JAX per-step reference
    r_logp, r_hid, r_attn = reference_forward(params, tokens, hidden, encoder_outputs)
    assert logp.shape == (T, VOCAB)
    assert new_hidden.shape == (1, 1, HIDDEN)
    assert attn_w.shape == (T, MAX_LEN)
    assert jnp.allclose(logp, r_logp, atol=1e-4), "log_softmax output mismatch"
    assert jnp.allclose(new_hidden, r_hid, atol=1e-4), "GRU hidden mismatch"
    assert jnp.allclose(attn_w, r_attn, atol=1e-4), "attention weights mismatch"

    print("KERNEL_OK")
</pallas_src>

<mosaic_0001>
module attributes {stable_mosaic.version = 11 : i64} {
  func.func @attn_decoder_kernel(%arg0: memref<1x32xf32, #tpu.memory_space<vmem>>, %arg1: memref<8x1x128xf32, #tpu.memory_space<vmem>>, %arg2: memref<8x1x128xf32, #tpu.memory_space<vmem>>, %arg3: memref<32x256xf32, #tpu.memory_space<vmem>>, %arg4: memref<1x256xf32, #tpu.memory_space<vmem>>, %arg5: memref<128x128xf32, #tpu.memory_space<vmem>>, %arg6: memref<8x1x32xf32, #tpu.memory_space<vmem>>, %arg7: memref<8x1x128xf32, #tpu.memory_space<vmem>>) attributes {dimension_semantics = [], scalar_prefetch = 0 : i64, scratch_operands = 0 : i64, tpu.core_type = #tpu.core_type<tc>} {
    %c0 = arith.constant 0 : index
    %c0_0 = arith.constant 0 : index
    %0 = vector.load %arg3[%c0, %c0_0] : memref<32x256xf32, #tpu.memory_space<vmem>>, vector<32x256xf32>
    %c0_1 = arith.constant 0 : index
    %c0_2 = arith.constant 0 : index
    %1 = vector.load %arg4[%c0_1, %c0_2] : memref<1x256xf32, #tpu.memory_space<vmem>>, vector<1x256xf32>
    %c0_3 = arith.constant 0 : index
    %c0_4 = arith.constant 0 : index
    %2 = vector.load %arg5[%c0_3, %c0_4] : memref<128x128xf32, #tpu.memory_space<vmem>>, vector<128x128xf32>
    %c0_5 = arith.constant 0 : index
    %c0_6 = arith.constant 0 : index
    %3 = vector.load %arg0[%c0_5, %c0_6] : memref<1x32xf32, #tpu.memory_space<vmem>>, vector<1x32xf32>
    %c0_i32 = arith.constant 0 : i32
    %cst = arith.constant dense<0.000000e+00> : vector<1x256xf32>
    %4 = tpu.matmul %3, %0, %cst {dimension_numbers = #tpu.dot_dimension_numbers<[1], [0], [0], [1], [0, 0, 1, 1], [], []>} : vector<1x32xf32>, vector<32x256xf32>, vector<1x256xf32> -> vector<1x256xf32>
    %5 = arith.addf %4, %1 : vector<1x256xf32>
    %6 = arith.index_cast %c0_i32 : i32 to index
    %c0_7 = arith.constant 0 : index
    %c0_8 = arith.constant 0 : index
    %7 = vector.load %arg1[%6, %c0_7, %c0_8] : memref<8x1x128xf32, #tpu.memory_space<vmem>>, vector<1x1x128xf32>
    %8 = vector.shape_cast %7 : vector<1x1x128xf32> to vector<1x128xf32>
    %9 = vector.extract_strided_slice %5 {offsets = [0, 0], sizes = [1, 128], strides = [1, 1]} : vector<1x256xf32> to vector<1x128xf32>
    %10 = arith.addf %8, %9 : vector<1x128xf32>
    %cst_9 = arith.constant dense<0xFF800000> : vector<1xf32>
    %11 = vector.multi_reduction <maximumf>, %10, %cst_9 [1] : vector<1x128xf32> to vector<1xf32>
    %12 = vector.shape_cast %11 : vector<1xf32> to vector<1x1xf32>
    %13 = vector.broadcast %12 : vector<1x1xf32> to vector<1x128xf32>
    %14 = arith.subf %10, %13 : vector<1x128xf32>
    %15 = math.exp %14 : vector<1x128xf32>
    %cst_10 = arith.constant dense<0.000000e+00> : vector<1xf32>
    %16 = vector.multi_reduction <add>, %15, %cst_10 [1] : vector<1x128xf32> to vector<1xf32>
    %17 = vector.shape_cast %16 : vector<1xf32> to vector<1x1xf32>
    %18 = vector.broadcast %17 : vector<1x1xf32> to vector<1x128xf32>
    %19 = arith.divf %15, %18 : vector<1x128xf32>
    %20 = arith.index_cast %c0_i32 : i32 to index
    %c0_11 = arith.constant 0 : index
    %c0_12 = arith.constant 0 : index
    %21 = vector.load %arg7[%20, %c0_11, %c0_12] : memref<8x1x128xf32, #tpu.memory_space<vmem>>, vector<1x1x128xf32>
    %22 = vector.shape_cast %21 : vector<1x1x128xf32> to vector<1x128xf32>
    %23 = vector.shape_cast %19 : vector<1x128xf32> to vector<1x1x128xf32>
    tpu.vector_store %arg7[%20, %c0_11, %c0_12], %23 {strides = array<i32>} : memref<8x1x128xf32, #tpu.memory_space<vmem>>, vector<1x1x128xf32>,
    %24 = arith.index_cast %c0_i32 : i32 to index
    %c0_13 = arith.constant 0 : index
    %c0_14 = arith.constant 0 : index
    %25 = vector.load %arg2[%24, %c0_13, %c0_14] : memref<8x1x128xf32, #tpu.memory_space<vmem>>, vector<1x1x128xf32>
    %26 = vector.shape_cast %25 : vector<1x1x128xf32> to vector<1x128xf32>
    %cst_15 = arith.constant dense<0.000000e+00> : vector<1x128xf32>
    %27 = tpu.matmul %19, %2, %cst_15 {dimension_numbers = #tpu.dot_dimension_numbers<[1], [0], [0], [1], [0, 0, 1, 1], [], []>} : vector<1x128xf32>, vector<128x128xf32>, vector<1x128xf32> -> vector<1x128xf32>
    %28 = arith.addf %26, %27 : vector<1x128xf32>
    %29 = vector.extract_strided_slice %28 {offsets = [0, 0], sizes = [1, 32], strides = [1, 1]} : vector<1x128xf32> to vector<1x32xf32>
    %30 = vector.extract_strided_slice %28 {offsets = [0, 32], sizes = [1, 32], strides = [1, 1]} : vector<1x128xf32> to vector<1x32xf32>
    %31 = vector.extract_strided_slice %28 {offsets = [0, 64], sizes = [1, 32], strides = [1, 1]} : vector<1x128xf32> to vector<1x32xf32>
    %32 = vector.extract_strided_slice %5 {offsets = [0, 128], sizes = [1, 32], strides = [1, 1]} : vector<1x256xf32> to vector<1x32xf32>
    %33 = vector.extract_strided_slice %5 {offsets = [0, 160], sizes = [1, 32], strides = [1, 1]} : vector<1x256xf32> to vector<1x32xf32>
    %34 = vector.extract_strided_slice %5 {offsets = [0, 192], sizes = [1, 32], strides = [1, 1]} : vector<1x256xf32> to vector<1x32xf32>
    %35 = arith.addf %29, %32 : vector<1x32xf32>
    %36 = arith.negf %35 : vector<1x32xf32>
    %37 = math.exp %36 : vector<1x32xf32>
    %cst_16 = arith.constant 1.000000e+00 : f32
    %38 = vector.broadcast %cst_16 : f32 to vector<1x32xf32>
    %39 = arith.addf %38, %37 : vector<1x32xf32>
    %40 = arith.divf %38, %39 : vector<1x32xf32>
    %41 = arith.addf %30, %33 : vector<1x32xf32>
    %42 = arith.negf %41 : vector<1x32xf32>
    %43 = math.exp %42 : vector<1x32xf32>
    %cst_17 = arith.constant 1.000000e+00 : f32
    %44 = vector.broadcast %cst_17 : f32 to vector<1x32xf32>
    %45 = arith.addf %44, %43 : vector<1x32xf32>
    %46 = arith.divf %44, %45 : vector<1x32xf32>
    %47 = arith.mulf %40, %34 : vector<1x32xf32>
    %48 = arith.addf %31, %47 : vector<1x32xf32>
    %49 = math.tanh %48 : vector<1x32xf32>
    %cst_18 = arith.constant 1.000000e+00 : f32
    %50 = vector.broadcast %cst_18 : f32 to vector<1x32xf32>
    %51 = arith.subf %50, %46 : vector<1x32xf32>
    %52 = arith.mulf %51, %49 : vector<1x32xf32>
    %53 = arith.mulf %46, %3 : vector<1x32xf32>
    %54 = arith.addf %52, %53 : vector<1x32xf32>
    %55 = arith.index_cast %c0_i32 : i32 to index
    %c0_19 = arith.constant 0 : index
    %c0_20 = arith.constant 0 : index
    %56 = vector.load %arg6[%55, %c0_19, %c0_20] : memref<8x1x32xf32, #tpu.memory_space<vmem>>, vector<1x1x32xf32>
    %57 = vector.shape_cast %56 : vector<1x1x32xf32> to vector<1x32xf32>
    %58 = vector.shape_cast %54 : vector<1x32xf32> to vector<1x1x32xf32>
    tpu.vector_store %arg6[%55, %c0_19, %c0_20], %58 {strides = array<i32>} : memref<8x1x32xf32, #tpu.memory_space<vmem>>, vector<1x1x32xf32>,
    %c1_i32 = arith.constant 1 : i32
    %cst_21 = arith.constant dense<0.000000e+00> : vector<1x256xf32>
    %59 = tpu.matmul %54, %0, %cst_21 {dimension_numbers = #tpu.dot_dimension_numbers<[1], [0], [0], [1], [0, 0, 1, 1], [], []>} : vector<1x32xf32>, vector<32x256xf32>, vector<1x256xf32> -> vector<1x256xf32>
    %60 = arith.addf %59, %1 : vector<1x256xf32>
    %61 = arith.index_cast %c1_i32 : i32 to index
    %c0_22 = arith.constant 0 : index
    %c0_23 = arith.constant 0 : index
    %62 = vector.load %arg1[%61, %c0_22, %c0_23] : memref<8x1x128xf32, #tpu.memory_space<vmem>>, vector<1x1x128xf32>
    %63 = vector.shape_cast %62 : vector<1x1x128xf32> to vector<1x128xf32>
    %64 = vector.extract_strided_slice %60 {offsets = [0, 0], sizes = [1, 128], strides = [1, 1]} : vector<1x256xf32> to vector<1x128xf32>
    %65 = arith.addf %63, %64 : vector<1x128xf32>
    %cst_24 = arith.constant dense<0xFF800000> : vector<1xf32>
    %66 = vector.multi_reduction <maximumf>, %65, %cst_24 [1] : vector<1x128xf32> to vector<1xf32>
    %67 = vector.shape_cast %66 : vector<1xf32> to vector<1x1xf32>
    %68 = vector.broadcast %67 : vector<1x1xf32> to vector<1x128xf32>
    %69 = arith.subf %65, %68 : vector<1x128xf32>
    %70 = math.exp %69 : vector<1x128xf32>
    %cst_25 = arith.constant dense<0.000000e+00> : vector<1xf32>
    %71 = vector.multi_reduction <add>, %70, %cst_25 [1] : vector<1x128xf32> to vector<1xf32>
    %72 = vector.shape_cast %71 : vector<1xf32> to vector<1x1xf32>
    %73 = vector.broadcast %72 : vector<1x1xf32> to vector<1x128xf32>
    %74 = arith.divf %70, %73 : vector<1x128xf32>
    %75 = arith.index_cast %c1_i32 : i32 to index
    %c0_26 = arith.constant 0 : index
    %c0_27 = arith.constant 0 : index
    %76 = vector.load %arg7[%75, %c0_26, %c0_27] : memref<8x1x128xf32, #tpu.memory_space<vmem>>, vector<1x1x128xf32>
    %77 = vector.shape_cast %76 : vector<1x1x128xf32> to vector<1x128xf32>
    %78 = vector.shape_cast %74 : vector<1x128xf32> to vector<1x1x128xf32>
    tpu.vector_store %arg7[%75, %c0_26, %c0_27], %78 {strides = array<i32>} : memref<8x1x128xf32, #tpu.memory_space<vmem>>, vector<1x1x128xf32>,
    %79 = arith.index_cast %c1_i32 : i32 to index
    %c0_28 = arith.constant 0 : index
    %c0_29 = arith.constant 0 : index
    %80 = vector.load %arg2[%79, %c0_28, %c0_29] : memref<8x1x128xf32, #tpu.memory_space<vmem>>, vector<1x1x128xf32>
    %81 = vector.shape_cast %80 : vector<1x1x128xf32> to vector<1x128xf32>
    %cst_30 = arith.constant dense<0.000000e+00> : vector<1x128xf32>
    %82 = tpu.matmul %74, %2, %cst_30 {dimension_numbers = #tpu.dot_dimension_numbers<[1], [0], [0], [1], [0, 0, 1, 1], [], []>} : vector<1x128xf32>, vector<128x128xf32>, vector<1x128xf32> -> vector<1x128xf32>
    %83 = arith.addf %81, %82 : vector<1x128xf32>
    %84 = vector.extract_strided_slice %83 {offsets = [0, 0], sizes = [1, 32], strides = [1, 1]} : vector<1x128xf32> to vector<1x32xf32>
    %85 = vector.extract_strided_slice %83 {offsets = [0, 32], sizes = [1, 32], strides = [1, 1]} : vector<1x128xf32> to vector<1x32xf32>
    %86 = vector.extract_strided_slice %83 {offsets = [0, 64], sizes = [1, 32], strides = [1, 1]} : vector<1x128xf32> to vector<1x32xf32>
    %87 = vector.extract_strided_slice %60 {offsets = [0, 128], sizes = [1, 32], strides = [1, 1]} : vector<1x256xf32> to vector<1x32xf32>
    %88 = vector.extract_strided_slice %60 {offsets = [0, 160], sizes = [1, 32], strides = [1, 1]} : vector<1x256xf32> to vector<1x32xf32>
    %89 = vector.extract_strided_slice %60 {offsets = [0, 192], sizes = [1, 32], strides = [1, 1]} : vector<1x256xf32> to vector<1x32xf32>
    %90 = arith.addf %84, %87 : vector<1x32xf32>
    %91 = arith.negf %90 : vector<1x32xf32>
    %92 = math.exp %91 : vector<1x32xf32>
    %cst_31 = arith.constant 1.000000e+00 : f32
    %93 = vector.broadcast %cst_31 : f32 to vector<1x32xf32>
    %94 = arith.addf %93, %92 : vector<1x32xf32>
    %95 = arith.divf %93, %94 : vector<1x32xf32>
    %96 = arith.addf %85, %88 : vector<1x32xf32>
    %97 = arith.negf %96 : vector<1x32xf32>
    %98 = math.exp %97 : vector<1x32xf32>
    %cst_32 = arith.constant 1.000000e+00 : f32
    %99 = vector.broadcast %cst_32 : f32 to vector<1x32xf32>
    %100 = arith.addf %99, %98 : vector<1x32xf32>
    %101 = arith.divf %99, %100 : vector<1x32xf32>
    %102 = arith.mulf %95, %89 : vector<1x32xf32>
    %103 = arith.addf %86, %102 : vector<1x32xf32>
    %104 = math.tanh %103 : vector<1x32xf32>
    %cst_33 = arith.constant 1.000000e+00 : f32
    %105 = vector.broadcast %cst_33 : f32 to vector<1x32xf32>
    %106 = arith.subf %105, %101 : vector<1x32xf32>
    %107 = arith.mulf %106, %104 : vector<1x32xf32>
    %108 = arith.mulf %101, %54 : vector<1x32xf32>
    %109 = arith.addf %107, %108 : vector<1x32xf32>
    %110 = arith.index_cast %c1_i32 : i32 to index
    %c0_34 = arith.constant 0 : index
    %c0_35 = arith.constant 0 : index
    %111 = vector.load %arg6[%110, %c0_34, %c0_35] : memref<8x1x32xf32, #tpu.memory_space<vmem>>, vector<1x1x32xf32>
    %112 = vector.shape_cast %111 : vector<1x1x32xf32> to vector<1x32xf32>
    %113 = vector.shape_cast %109 : vector<1x32xf32> to vector<1x1x32xf32>
    tpu.vector_store %arg6[%110, %c0_34, %c0_35], %113 {strides = array<i32>} : memref<8x1x32xf32, #tpu.memory_space<vmem>>, vector<1x1x32xf32>,
    %c2_i32 = arith.constant 2 : i32
    %cst_36 = arith.constant dense<0.000000e+00> : vector<1x256xf32>
    %114 = tpu.matmul %109, %0, %cst_36 {dimension_numbers = #tpu.dot_dimension_numbers<[1], [0], [0], [1], [0, 0, 1, 1], [], []>} : vector<1x32xf32>, vector<32x256xf32>, vector<1x256xf32> -> vector<1x256xf32>
    %115 = arith.addf %114, %1 : vector<1x256xf32>
    %116 = arith.index_cast %c2_i32 : i32 to index
    %c0_37 = arith.constant 0 : index
    %c0_38 = arith.constant 0 : index
    %117 = vector.load %arg1[%116, %c0_37, %c0_38] : memref<8x1x128xf32, #tpu.memory_space<vmem>>, vector<1x1x128xf32>
    %118 = vector.shape_cast %117 : vector<1x1x128xf32> to vector<1x128xf32>
    %119 = vector.extract_strided_slice %115 {offsets = [0, 0], sizes = [1, 128], strides = [1, 1]} : vector<1x256xf32> to vector<1x128xf32>
    %120 = arith.addf %118, %119 : vector<1x128xf32>
    %cst_39 = arith.constant dense<0xFF800000> : vector<1xf32>
    %121 = vector.multi_reduction <maximumf>, %120, %cst_39 [1] : vector<1x128xf32> to vector<1xf32>
    %122 = vector.shape_cast %121 : vector<1xf32> to vector<1x1xf32>
    %123 = vector.broadcast %122 : vector<1x1xf32> to vector<1x128xf32>
    %124 = arith.subf %120, %123 : vector<1x128xf32>
    %125 = math.exp %124 : vector<1x128xf32>
    %cst_40 = arith.constant dense<0.000000e+00> : vector<1xf32>
    %126 = vector.multi_reduction <add>, %125, %cst_40 [1] : vector<1x128xf32> to vector<1xf32>
    %127 = vector.shape_cast %126 : vector<1xf32> to vector<1x1xf32>
    %128 = vector.broadcast %127 : vector<1x1xf32> to vector<1x128xf32>
    %129 = arith.divf %125, %128 : vector<1x128xf32>
    %130 = arith.index_cast %c2_i32 : i32 to index
    %c0_41 = arith.constant 0 : index
    %c0_42 = arith.constant 0 : index
    %131 = vector.load %arg7[%130, %c0_41, %c0_42] : memref<8x1x128xf32, #tpu.memory_space<vmem>>, vector<1x1x128xf32>
    %132 = vector.shape_cast %131 : vector<1x1x128xf32> to vector<1x128xf32>
    %133 = vector.shape_cast %129 : vector<1x128xf32> to vector<1x1x128xf32>
    tpu.vector_store %arg7[%130, %c0_41, %c0_42], %133 {strides = array<i32>} : memref<8x1x128xf32, #tpu.memory_space<vmem>>, vector<1x1x128xf32>,
    %134 = arith.index_cast %c2_i32 : i32 to index
    %c0_43 = arith.constant 0 : index
    %c0_44 = arith.constant 0 : index
    %135 = vector.load %arg2[%134, %c0_43, %c0_44] : memref<8x1x128xf32, #tpu.memory_space<vmem>>, vector<1x1x128xf32>
    %136 = vector.shape_cast %135 : vector<1x1x128xf32> to vector<1x128xf32>
    %cst_45 = arith.constant dense<0.000000e+00> : vector<1x128xf32>
    %137 = tpu.matmul %129, %2, %cst_45 {dimension_numbers = #tpu.dot_dimension_numbers<[1], [0], [0], [1], [0, 0, 1, 1], [], []>} : vector<1x128xf32>, vector<128x128xf32>, vector<1x128xf32> -> vector<1x128xf32>
    %138 = arith.addf %136, %137 : vector<1x128xf32>
    %139 = vector.extract_strided_slice %138 {offsets = [0, 0], sizes = [1, 32], strides = [1, 1]} : vector<1x128xf32> to vector<1x32xf32>
    %140 = vector.extract_strided_slice %138 {offsets = [0, 32], sizes = [1, 32], strides = [1, 1]} : vector<1x128xf32> to vector<1x32xf32>
    %141 = vector.extract_strided_slice %138 {offsets = [0, 64], sizes = [1, 32], strides = [1, 1]} : vector<1x128xf32> to vector<1x32xf32>
    %142 = vector.extract_strided_slice %115 {offsets = [0, 128], sizes = [1, 32], strides = [1, 1]} : vector<1x256xf32> to vector<1x32xf32>
    %143 = vector.extract_strided_slice %115 {offsets = [0, 160], sizes = [1, 32], strides = [1, 1]} : vector<1x256xf32> to vector<1x32xf32>
    %144 = vector.extract_strided_slice %115 {offsets = [0, 192], sizes = [1, 32], strides = [1, 1]} : vector<1x256xf32> to vector<1x32xf32>
    %145 = arith.addf %139, %142 : vector<1x32xf32>
    %146 = arith.negf %145 : vector<1x32xf32>
    %147 = math.exp %146 : vector<1x32xf32>
    %cst_46 = arith.constant 1.000000e+00 : f32
    %148 = vector.broadcast %cst_46 : f32 to vector<1x32xf32>
    %149 = arith.addf %148, %147 : vector<1x32xf32>
    %150 = arith.divf %148, %149 : vector<1x32xf32>
    %151 = arith.addf %140, %143 : vector<1x32xf32>
    %152 = arith.negf %151 : vector<1x32xf32>
    %153 = math.exp %152 : vector<1x32xf32>
    %cst_47 = arith.constant 1.000000e+00 : f32
    %154 = vector.broadcast %cst_47 : f32 to vector<1x32xf32>
    %155 = arith.addf %154, %153 : vector<1x32xf32>
    %156 = arith.divf %154, %155 : vector<1x32xf32>
    %157 = arith.mulf %150, %144 : vector<1x32xf32>
    %158 = arith.addf %141, %157 : vector<1x32xf32>
    %159 = math.tanh %158 : vector<1x32xf32>
    %cst_48 = arith.constant 1.000000e+00 : f32
    %160 = vector.broadcast %cst_48 : f32 to vector<1x32xf32>
    %161 = arith.subf %160, %156 : vector<1x32xf32>
    %162 = arith.mulf %161, %159 : vector<1x32xf32>
    %163 = arith.mulf %156, %109 : vector<1x32xf32>
    %164 = arith.addf %162, %163 : vector<1x32xf32>
    %165 = arith.index_cast %c2_i32 : i32 to index
    %c0_49 = arith.constant 0 : index
    %c0_50 = arith.constant 0 : index
    %166 = vector.load %arg6[%165, %c0_49, %c0_50] : memref<8x1x32xf32, #tpu.memory_space<vmem>>, vector<1x1x32xf32>
    %167 = vector.shape_cast %166 : vector<1x1x32xf32> to vector<1x32xf32>
    %168 = vector.shape_cast %164 : vector<1x32xf32> to vector<1x1x32xf32>
    tpu.vector_store %arg6[%165, %c0_49, %c0_50], %168 {strides = array<i32>} : memref<8x1x32xf32, #tpu.memory_space<vmem>>, vector<1x1x32xf32>,
    %c3_i32 = arith.constant 3 : i32
    %cst_51 = arith.constant dense<0.000000e+00> : vector<1x256xf32>
    %169 = tpu.matmul %164, %0, %cst_51 {dimension_numbers = #tpu.dot_dimension_numbers<[1], [0], [0], [1], [0, 0, 1, 1], [], []>} : vector<1x32xf32>, vector<32x256xf32>, vector<1x256xf32> -> vector<1x256xf32>
    %170 = arith.addf %169, %1 : vector<1x256xf32>
    %171 = arith.index_cast %c3_i32 : i32 to index
    %c0_52 = arith.constant 0 : index
    %c0_53 = arith.constant 0 : index
    %172 = vector.load %arg1[%171, %c0_52, %c0_53] : memref<8x1x128xf32, #tpu.memory_space<vmem>>, vector<1x1x128xf32>
    %173 = vector.shape_cast %172 : vector<1x1x128xf32> to vector<1x128xf32>
    %174 = vector.extract_strided_slice %170 {offsets = [0, 0], sizes = [1, 128], strides = [1, 1]} : vector<1x256xf32> to vector<1x128xf32>
    %175 = arith.addf %173, %174 : vector<1x128xf32>
    %cst_54 = arith.constant dense<0xFF800000> : vector<1xf32>
    %176 = vector.multi_reduction <maximumf>, %175, %cst_54 [1] : vector<1x128xf32> to vector<1xf32>
    %177 = vector.shape_cast %176 : vector<1xf32> to vector<1x1xf32>
    %178 = vector.broadcast %177 : vector<1x1xf32> to vector<1x128xf32>
    %179 = arith.subf %175, %178 : vector<1x128xf32>
    %180 = math.exp %179 : vector<1x128xf32>
    %cst_55 = arith.constant dense<0.000000e+00> : vector<1xf32>
    %181 = vector.multi_reduction <add>, %180, %cst_55 [1] : vector<1x128xf32> to vector<1xf32>
    %182 = vector.shape_cast %181 : vector<1xf32> to vector<1x1xf32>
    %183 = vector.broadcast %182 : vector<1x1xf32> to vector<1x128xf32>
    %184 = arith.divf %180, %183 : vector<1x128xf32>
    %185 = arith.index_cast %c3_i32 : i32 to index
    %c0_56 = arith.constant 0 : index
    %c0_57 = arith.constant 0 : index
    %186 = vector.load %arg7[%185, %c0_56, %c0_57] : memref<8x1x128xf32, #tpu.memory_space<vmem>>, vector<1x1x128xf32>
    %187 = vector.shape_cast %186 : vector<1x1x128xf32> to vector<1x128xf32>
    %188 = vector.shape_cast %184 : vector<1x128xf32> to vector<1x1x128xf32>
    tpu.vector_store %arg7[%185, %c0_56, %c0_57], %188 {strides = array<i32>} : memref<8x1x128xf32, #tpu.memory_space<vmem>>, vector<1x1x128xf32>,
    %189 = arith.index_cast %c3_i32 : i32 to index
    %c0_58 = arith.constant 0 : index
    %c0_59 = arith.constant 0 : index
    %190 = vector.load %arg2[%189, %c0_58, %c0_59] : memref<8x1x128xf32, #tpu.memory_space<vmem>>, vector<1x1x128xf32>
    %191 = vector.shape_cast %190 : vector<1x1x128xf32> to vector<1x128xf32>
    %cst_60 = arith.constant dense<0.000000e+00> : vector<1x128xf32>
    %192 = tpu.matmul %184, %2, %cst_60 {dimension_numbers = #tpu.dot_dimension_numbers<[1], [0], [0], [1], [0, 0, 1, 1], [], []>} : vector<1x128xf32>, vector<128x128xf32>, vector<1x128xf32> -> vector<1x128xf32>
    %193 = arith.addf %191, %192 : vector<1x128xf32>
    %194 = vector.extract_strided_slice %193 {offsets = [0, 0], sizes = [1, 32], strides = [1, 1]} : vector<1x128xf32> to vector<1x32xf32>
    %195 = vector.extract_strided_slice %193 {offsets = [0, 32], sizes = [1, 32], strides = [1, 1]} : vector<1x128xf32> to vector<1x32xf32>
    %196 = vector.extract_strided_slice %193 {offsets = [0, 64], sizes = [1, 32], strides = [1, 1]} : vector<1x128xf32> to vector<1x32xf32>
    %197 = vector.extract_strided_slice %170 {offsets = [0, 128], sizes = [1, 32], strides = [1, 1]} : vector<1x256xf32> to vector<1x32xf32>
    %198 = vector.extract_strided_slice %170 {offsets = [0, 160], sizes = [1, 32], strides = [1, 1]} : vector<1x256xf32> to vector<1x32xf32>
    %199 = vector.extract_strided_slice %170 {offsets = [0, 192], sizes = [1, 32], strides = [1, 1]} : vector<1x256xf32> to vector<1x32xf32>
    %200 = arith.addf %194, %197 : vector<1x32xf32>
    %201 = arith.negf %200 : vector<1x32xf32>
    %202 = math.exp %201 : vector<1x32xf32>
    %cst_61 = arith.constant 1.000000e+00 : f32
    %203 = vector.broadcast %cst_61 : f32 to vector<1x32xf32>
    %204 = arith.addf %203, %202 : vector<1x32xf32>
    %205 = arith.divf %203, %204 : vector<1x32xf32>
    %206 = arith.addf %195, %198 : vector<1x32xf32>
    %207 = arith.negf %206 : vector<1x32xf32>
    %208 = math.exp %207 : vector<1x32xf32>
    %cst_62 = arith.constant 1.000000e+00 : f32
    %209 = vector.broadcast %cst_62 : f32 to vector<1x32xf32>
    %210 = arith.addf %209, %208 : vector<1x32xf32>
    %211 = arith.divf %209, %210 : vector<1x32xf32>
    %212 = arith.mulf %205, %199 : vector<1x32xf32>
    %213 = arith.addf %196, %212 : vector<1x32xf32>
    %214 = math.tanh %213 : vector<1x32xf32>
    %cst_63 = arith.constant 1.000000e+00 : f32
    %215 = vector.broadcast %cst_63 : f32 to vector<1x32xf32>
    %216 = arith.subf %215, %211 : vector<1x32xf32>
    %217 = arith.mulf %216, %214 : vector<1x32xf32>
    %218 = arith.mulf %211, %164 : vector<1x32xf32>
    %219 = arith.addf %217, %218 : vector<1x32xf32>
    %220 = arith.index_cast %c3_i32 : i32 to index
    %c0_64 = arith.constant 0 : index
    %c0_65 = arith.constant 0 : index
    %221 = vector.load %arg6[%220, %c0_64, %c0_65] : memref<8x1x32xf32, #tpu.memory_space<vmem>>, vector<1x1x32xf32>
    %222 = vector.shape_cast %221 : vector<1x1x32xf32> to vector<1x32xf32>
    %223 = vector.shape_cast %219 : vector<1x32xf32> to vector<1x1x32xf32>
    tpu.vector_store %arg6[%220, %c0_64, %c0_65], %223 {strides = array<i32>} : memref<8x1x32xf32, #tpu.memory_space<vmem>>, vector<1x1x32xf32>,
    %c4_i32 = arith.constant 4 : i32
    %cst_66 = arith.constant dense<0.000000e+00> : vector<1x256xf32>
    %224 = tpu.matmul %219, %0, %cst_66 {dimension_numbers = #tpu.dot_dimension_numbers<[1], [0], [0], [1], [0, 0, 1, 1], [], []>} : vector<1x32xf32>, vector<32x256xf32>, vector<1x256xf32> -> vector<1x256xf32>
    %225 = arith.addf %224, %1 : vector<1x256xf32>
    %226 = arith.index_cast %c4_i32 : i32 to index
    %c0_67 = arith.constant 0 : index
    %c0_68 = arith.constant 0 : index
    %227 = vector.load %arg1[%226, %c0_67, %c0_68] : memref<8x1x128xf32, #tpu.memory_space<vmem>>, vector<1x1x128xf32>
    %228 = vector.shape_cast %227 : vector<1x1x128xf32> to vector<1x128xf32>
    %229 = vector.extract_strided_slice %225 {offsets = [0, 0], sizes = [1, 128], strides = [1, 1]} : vector<1x256xf32> to vector<1x128xf32>
    %230 = arith.addf %228, %229 : vector<1x128xf32>
    %cst_69 = arith.constant dense<0xFF800000> : vector<1xf32>
    %231 = vector.multi_reduction <maximumf>, %230, %cst_69 [1] : vector<1x128xf32> to vector<1xf32>
    %232 = vector.shape_cast %231 : vector<1xf32> to vector<1x1xf32>
    %233 = vector.broadcast %232 : vector<1x1xf32> to vector<1x128xf32>
    %234 = arith.subf %230, %233 : vector<1x128xf32>
    %235 = math.exp %234 : vector<1x128xf32>
    %cst_70 = arith.constant dense<0.000000e+00> : vector<1xf32>
    %236 = vector.multi_reduction <add>, %235, %cst_70 [1] : vector<1x128xf32> to vector<1xf32>
    %237 = vector.shape_cast %236 : vector<1xf32> to vector<1x1xf32>
    %238 = vector.broadcast %237 : vector<1x1xf32> to vector<1x128xf32>
    %239 = arith.divf %235, %238 : vector<1x128xf32>
    %240 = arith.index_cast %c4_i32 : i32 to index
    %c0_71 = arith.constant 0 : index
    %c0_72 = arith.constant 0 : index
    %241 = vector.load %arg7[%240, %c0_71, %c0_72] : memref<8x1x128xf32, #tpu.memory_space<vmem>>, vector<1x1x128xf32>
    %242 = vector.shape_cast %241 : vector<1x1x128xf32> to vector<1x128xf32>
    %243 = vector.shape_cast %239 : vector<1x128xf32> to vector<1x1x128xf32>
    tpu.vector_store %arg7[%240, %c0_71, %c0_72], %243 {strides = array<i32>} : memref<8x1x128xf32, #tpu.memory_space<vmem>>, vector<1x1x128xf32>,
    %244 = arith.index_cast %c4_i32 : i32 to index
    %c0_73 = arith.constant 0 : index
    %c0_74 = arith.constant 0 : index
    %245 = vector.load %arg2[%244, %c0_73, %c0_74] : memref<8x1x128xf32, #tpu.memory_space<vmem>>, vector<1x1x128xf32>
    %246 = vector.shape_cast %245 : vector<1x1x128xf32> to vector<1x128xf32>
    %cst_75 = arith.constant dense<0.000000e+00> : vector<1x128xf32>
    %247 = tpu.matmul %239, %2, %cst_75 {dimension_numbers = #tpu.dot_dimension_numbers<[1], [0], [0], [1], [0, 0, 1, 1], [], []>} : vector<1x128xf32>, vector<128x128xf32>, vector<1x128xf32> -> vector<1x128xf32>
    %248 = arith.addf %246, %247 : vector<1x128xf32>
    %249 = vector.extract_strided_slice %248 {offsets = [0, 0], sizes = [1, 32], strides = [1, 1]} : vector<1x128xf32> to vector<1x32xf32>
    %250 = vector.extract_strided_slice %248 {offsets = [0, 32], sizes = [1, 32], strides = [1, 1]} : vector<1x128xf32> to vector<1x32xf32>
    %251 = vector.extract_strided_slice %248 {offsets = [0, 64], sizes = [1, 32], strides = [1, 1]} : vector<1x128xf32> to vector<1x32xf32>
    %252 = vector.extract_strided_slice %225 {offsets = [0, 128], sizes = [1, 32], strides = [1, 1]} : vector<1x256xf32> to vector<1x32xf32>
    %253 = vector.extract_strided_slice %225 {offsets = [0, 160], sizes = [1, 32], strides = [1, 1]} : vector<1x256xf32> to vector<1x32xf32>
    %254 = vector.extract_strided_slice %225 {offsets = [0, 192], sizes = [1, 32], strides = [1, 1]} : vector<1x256xf32> to vector<1x32xf32>
    %255 = arith.addf %249, %252 : vector<1x32xf32>
    %256 = arith.negf %255 : vector<1x32xf32>
    %257 = math.exp %256 : vector<1x32xf32>
    %cst_76 = arith.constant 1.000000e+00 : f32
    %258 = vector.broadcast %cst_76 : f32 to vector<1x32xf32>
    %259 = arith.addf %258, %257 : vector<1x32xf32>
    %260 = arith.divf %258, %259 : vector<1x32xf32>
    %261 = arith.addf %250, %253 : vector<1x32xf32>
    %262 = arith.negf %261 : vector<1x32xf32>
    %263 = math.exp %262 : vector<1x32xf32>
    %cst_77 = arith.constant 1.000000e+00 : f32
    %264 = vector.broadcast %cst_77 : f32 to vector<1x32xf32>
    %265 = arith.addf %264, %263 : vector<1x32xf32>
    %266 = arith.divf %264, %265 : vector<1x32xf32>
    %267 = arith.mulf %260, %254 : vector<1x32xf32>
    %268 = arith.addf %251, %267 : vector<1x32xf32>
    %269 = math.tanh %268 : vector<1x32xf32>
    %cst_78 = arith.constant 1.000000e+00 : f32
    %270 = vector.broadcast %cst_78 : f32 to vector<1x32xf32>
    %271 = arith.subf %270, %266 : vector<1x32xf32>
    %272 = arith.mulf %271, %269 : vector<1x32xf32>
    %273 = arith.mulf %266, %219 : vector<1x32xf32>
    %274 = arith.addf %272, %273 : vector<1x32xf32>
    %275 = arith.index_cast %c4_i32 : i32 to index
    %c0_79 = arith.constant 0 : index
    %c0_80 = arith.constant 0 : index
    %276 = vector.load %arg6[%275, %c0_79, %c0_80] : memref<8x1x32xf32, #tpu.memory_space<vmem>>, vector<1x1x32xf32>
    %277 = vector.shape_cast %276 : vector<1x1x32xf32> to vector<1x32xf32>
    %278 = vector.shape_cast %274 : vector<1x32xf32> to vector<1x1x32xf32>
    tpu.vector_store %arg6[%275, %c0_79, %c0_80], %278 {strides = array<i32>} : memref<8x1x32xf32, #tpu.memory_space<vmem>>, vector<1x1x32xf32>,
    %c5_i32 = arith.constant 5 : i32
    %cst_81 = arith.constant dense<0.000000e+00> : vector<1x256xf32>
    %279 = tpu.matmul %274, %0, %cst_81 {dimension_numbers = #tpu.dot_dimension_numbers<[1], [0], [0], [1], [0, 0, 1, 1], [], []>} : vector<1x32xf32>, vector<32x256xf32>, vector<1x256xf32> -> vector<1x256xf32>
    %280 = arith.addf %279, %1 : vector<1x256xf32>
    %281 = arith.index_cast %c5_i32 : i32 to index
    %c0_82 = arith.constant 0 : index
    %c0_83 = arith.constant 0 : index
    %282 = vector.load %arg1[%281, %c0_82, %c0_83] : memref<8x1x128xf32, #tpu.memory_space<vmem>>, vector<1x1x128xf32>
    %283 = vector.shape_cast %282 : vector<1x1x128xf32> to vector<1x128xf32>
    %284 = vector.extract_strided_slice %280 {offsets = [0, 0], sizes = [1, 128], strides = [1, 1]} : vector<1x256xf32> to vector<1x128xf32>
    %285 = arith.addf %283, %284 : vector<1x128xf32>
    %cst_84 = arith.constant dense<0xFF800000> : vector<1xf32>
    %286 = vector.multi_reduction <maximumf>, %285, %cst_84 [1] : vector<1x128xf32> to vector<1xf32>
    %287 = vector.shape_cast %286 : vector<1xf32> to vector<1x1xf32>
    %288 = vector.broadcast %287 : vector<1x1xf32> to vector<1x128xf32>
    %289 = arith.subf %285, %288 : vector<1x128xf32>
    %290 = math.exp %289 : vector<1x128xf32>
    %cst_85 = arith.constant dense<0.000000e+00> : vector<1xf32>
    %291 = vector.multi_reduction <add>, %290, %cst_85 [1] : vector<1x128xf32> to vector<1xf32>
    %292 = vector.shape_cast %291 : vector<1xf32> to vector<1x1xf32>
    %293 = vector.broadcast %292 : vector<1x1xf32> to vector<1x128xf32>
    %294 = arith.divf %290, %293 : vector<1x128xf32>
    %295 = arith.index_cast %c5_i32 : i32 to index
    %c0_86 = arith.constant 0 : index
    %c0_87 = arith.constant 0 : index
    %296 = vector.load %arg7[%295, %c0_86, %c0_87] : memref<8x1x128xf32, #tpu.memory_space<vmem>>, vector<1x1x128xf32>
    %297 = vector.shape_cast %296 : vector<1x1x128xf32> to vector<1x128xf32>
    %298 = vector.shape_cast %294 : vector<1x128xf32> to vector<1x1x128xf32>
    tpu.vector_store %arg7[%295, %c0_86, %c0_87], %298 {strides = array<i32>} : memref<8x1x128xf32, #tpu.memory_space<vmem>>, vector<1x1x128xf32>,
    %299 = arith.index_cast %c5_i32 : i32 to index
    %c0_88 = arith.constant 0 : index
    %c0_89 = arith.constant 0 : index
    %300 = vector.load %arg2[%299, %c0_88, %c0_89] : memref<8x1x128xf32, #tpu.memory_space<vmem>>, vector<1x1x128xf32>
    %301 = vector.shape_cast %300 : vector<1x1x128xf32> to vector<1x128xf32>
    %cst_90 = arith.constant dense<0.000000e+00> : vector<1x128xf32>
    %302 = tpu.matmul %294, %2, %cst_90 {dimension_numbers = #tpu.dot_dimension_numbers<[1], [0], [0], [1], [0, 0, 1, 1], [], []>} : vector<1x128xf32>, vector<128x128xf32>, vector<1x128xf32> -> vector<1x128xf32>
    %303 = arith.addf %301, %302 : vector<1x128xf32>
    %304 = vector.extract_strided_slice %303 {offsets = [0, 0], sizes = [1, 32], strides = [1, 1]} : vector<1x128xf32> to vector<1x32xf32>
    %305 = vector.extract_strided_slice %303 {offsets = [0, 32], sizes = [1, 32], strides = [1, 1]} : vector<1x128xf32> to vector<1x32xf32>
    %306 = vector.extract_strided_slice %303 {offsets = [0, 64], sizes = [1, 32], strides = [1, 1]} : vector<1x128xf32> to vector<1x32xf32>
    %307 = vector.extract_strided_slice %280 {offsets = [0, 128], sizes = [1, 32], strides = [1, 1]} : vector<1x256xf32> to vector<1x32xf32>
    %308 = vector.extract_strided_slice %280 {offsets = [0, 160], sizes = [1, 32], strides = [1, 1]} : vector<1x256xf32> to vector<1x32xf32>
    %309 = vector.extract_strided_slice %280 {offsets = [0, 192], sizes = [1, 32], strides = [1, 1]} : vector<1x256xf32> to vector<1x32xf32>
    %310 = arith.addf %304, %307 : vector<1x32xf32>
    %311 = arith.negf %310 : vector<1x32xf32>
    %312 = math.exp %311 : vector<1x32xf32>
    %cst_91 = arith.constant 1.000000e+00 : f32
    %313 = vector.broadcast %cst_91 : f32 to vector<1x32xf32>
    %314 = arith.addf %313, %312 : vector<1x32xf32>
    %315 = arith.divf %313, %314 : vector<1x32xf32>
    %316 = arith.addf %305, %308 : vector<1x32xf32>
    %317 = arith.negf %316 : vector<1x32xf32>
    %318 = math.exp %317 : vector<1x32xf32>
    %cst_92 = arith.constant 1.000000e+00 : f32
    %319 = vector.broadcast %cst_92 : f32 to vector<1x32xf32>
    %320 = arith.addf %319, %318 : vector<1x32xf32>
    %321 = arith.divf %319, %320 : vector<1x32xf32>
    %322 = arith.mulf %315, %309 : vector<1x32xf32>
    %323 = arith.addf %306, %322 : vector<1x32xf32>
    %324 = math.tanh %323 : vector<1x32xf32>
    %cst_93 = arith.constant 1.000000e+00 : f32
    %325 = vector.broadcast %cst_93 : f32 to vector<1x32xf32>
    %326 = arith.subf %325, %321 : vector<1x32xf32>
    %327 = arith.mulf %326, %324 : vector<1x32xf32>
    %328 = arith.mulf %321, %274 : vector<1x32xf32>
    %329 = arith.addf %327, %328 : vector<1x32xf32>
    %330 = arith.index_cast %c5_i32 : i32 to index
    %c0_94 = arith.constant 0 : index
    %c0_95 = arith.constant 0 : index
    %331 = vector.load %arg6[%330, %c0_94, %c0_95] : memref<8x1x32xf32, #tpu.memory_space<vmem>>, vector<1x1x32xf32>
    %332 = vector.shape_cast %331 : vector<1x1x32xf32> to vector<1x32xf32>
    %333 = vector.shape_cast %329 : vector<1x32xf32> to vector<1x1x32xf32>
    tpu.vector_store %arg6[%330, %c0_94, %c0_95], %333 {strides = array<i32>} : memref<8x1x32xf32, #tpu.memory_space<vmem>>, vector<1x1x32xf32>,
    %c6_i32 = arith.constant 6 : i32
    %cst_96 = arith.constant dense<0.000000e+00> : vector<1x256xf32>
    %334 = tpu.matmul %329, %0, %cst_96 {dimension_numbers = #tpu.dot_dimension_numbers<[1], [0], [0], [1], [0, 0, 1, 1], [], []>} : vector<1x32xf32>, vector<32x256xf32>, vector<1x256xf32> -> vector<1x256xf32>
    %335 = arith.addf %334, %1 : vector<1x256xf32>
    %336 = arith.index_cast %c6_i32 : i32 to index
    %c0_97 = arith.constant 0 : index
    %c0_98 = arith.constant 0 : index
    %337 = vector.load %arg1[%336, %c0_97, %c0_98] : memref<8x1x128xf32, #tpu.memory_space<vmem>>, vector<1x1x128xf32>
    %338 = vector.shape_cast %337 : vector<1x1x128xf32> to vector<1x128xf32>
    %339 = vector.extract_strided_slice %335 {offsets = [0, 0], sizes = [1, 128], strides = [1, 1]} : vector<1x256xf32> to vector<1x128xf32>
    %340 = arith.addf %338, %339 : vector<1x128xf32>
    %cst_99 = arith.constant dense<0xFF800000> : vector<1xf32>
    %341 = vector.multi_reduction <maximumf>, %340, %cst_99 [1] : vector<1x128xf32> to vector<1xf32>
    %342 = vector.shape_cast %341 : vector<1xf32> to vector<1x1xf32>
    %343 = vector.broadcast %342 : vector<1x1xf32> to vector<1x128xf32>
    %344 = arith.subf %340, %343 : vector<1x128xf32>
    %345 = math.exp %344 : vector<1x128xf32>
    %cst_100 = arith.constant dense<0.000000e+00> : vector<1xf32>
    %346 = vector.multi_reduction <add>, %345, %cst_100 [1] : vector<1x128xf32> to vector<1xf32>
    %347 = vector.shape_cast %346 : vector<1xf32> to vector<1x1xf32>
    %348 = vector.broadcast %347 : vector<1x1xf32> to vector<1x128xf32>
    %349 = arith.divf %345, %348 : vector<1x128xf32>
    %350 = arith.index_cast %c6_i32 : i32 to index
    %c0_101 = arith.constant 0 : index
    %c0_102 = arith.constant 0 : index
    %351 = vector.load %arg7[%350, %c0_101, %c0_102] : memref<8x1x128xf32, #tpu.memory_space<vmem>>, vector<1x1x128xf32>
    %352 = vector.shape_cast %351 : vector<1x1x128xf32> to vector<1x128xf32>
    %353 = vector.shape_cast %349 : vector<1x128xf32> to vector<1x1x128xf32>
    tpu.vector_store %arg7[%350, %c0_101, %c0_102], %353 {strides = array<i32>} : memref<8x1x128xf32, #tpu.memory_space<vmem>>, vector<1x1x128xf32>,
    %354 = arith.index_cast %c6_i32 : i32 to index
    %c0_103 = arith.constant 0 : index
    %c0_104 = arith.constant 0 : index
    %355 = vector.load %arg2[%354, %c0_103, %c0_104] : memref<8x1x128xf32, #tpu.memory_space<vmem>>, vector<1x1x128xf32>
    %356 = vector.shape_cast %355 : vector<1x1x128xf32> to vector<1x128xf32>
    %cst_105 = arith.constant dense<0.000000e+00> : vector<1x128xf32>
    %357 = tpu.matmul %349, %2, %cst_105 {dimension_numbers = #tpu.dot_dimension_numbers<[1], [0], [0], [1], [0, 0, 1, 1], [], []>} : vector<1x128xf32>, vector<128x128xf32>, vector<1x128xf32> -> vector<1x128xf32>
    %358 = arith.addf %356, %357 : vector<1x128xf32>
    %359 = vector.extract_strided_slice %358 {offsets = [0, 0], sizes = [1, 32], strides = [1, 1]} : vector<1x128xf32> to vector<1x32xf32>
    %360 = vector.extract_strided_slice %358 {offsets = [0, 32], sizes = [1, 32], strides = [1, 1]} : vector<1x128xf32> to vector<1x32xf32>
    %361 = vector.extract_strided_slice %358 {offsets = [0, 64], sizes = [1, 32], strides = [1, 1]} : vector<1x128xf32> to vector<1x32xf32>
    %362 = vector.extract_strided_slice %335 {offsets = [0, 128], sizes = [1, 32], strides = [1, 1]} : vector<1x256xf32> to vector<1x32xf32>
    %363 = vector.extract_strided_slice %335 {offsets = [0, 160], sizes = [1, 32], strides = [1, 1]} : vector<1x256xf32> to vector<1x32xf32>
    %364 = vector.extract_strided_slice %335 {offsets = [0, 192], sizes = [1, 32], strides = [1, 1]} : vector<1x256xf32> to vector<1x32xf32>
    %365 = arith.addf %359, %362 : vector<1x32xf32>
    %366 = arith.negf %365 : vector<1x32xf32>
    %367 = math.exp %366 : vector<1x32xf32>
    %cst_106 = arith.constant 1.000000e+00 : f32
    %368 = vector.broadcast %cst_106 : f32 to vector<1x32xf32>
    %369 = arith.addf %368, %367 : vector<1x32xf32>
    %370 = arith.divf %368, %369 : vector<1x32xf32>
    %371 = arith.addf %360, %363 : vector<1x32xf32>
    %372 = arith.negf %371 : vector<1x32xf32>
    %373 = math.exp %372 : vector<1x32xf32>
    %cst_107 = arith.constant 1.000000e+00 : f32
    %374 = vector.broadcast %cst_107 : f32 to vector<1x32xf32>
    %375 = arith.addf %374, %373 : vector<1x32xf32>
    %376 = arith.divf %374, %375 : vector<1x32xf32>
    %377 = arith.mulf %370, %364 : vector<1x32xf32>
    %378 = arith.addf %361, %377 : vector<1x32xf32>
    %379 = math.tanh %378 : vector<1x32xf32>
    %cst_108 = arith.constant 1.000000e+00 : f32
    %380 = vector.broadcast %cst_108 : f32 to vector<1x32xf32>
    %381 = arith.subf %380, %376 : vector<1x32xf32>
    %382 = arith.mulf %381, %379 : vector<1x32xf32>
    %383 = arith.mulf %376, %329 : vector<1x32xf32>
    %384 = arith.addf %382, %383 : vector<1x32xf32>
    %385 = arith.index_cast %c6_i32 : i32 to index
    %c0_109 = arith.constant 0 : index
    %c0_110 = arith.constant 0 : index
    %386 = vector.load %arg6[%385, %c0_109, %c0_110] : memref<8x1x32xf32, #tpu.memory_space<vmem>>, vector<1x1x32xf32>
    %387 = vector.shape_cast %386 : vector<1x1x32xf32> to vector<1x32xf32>
    %388 = vector.shape_cast %384 : vector<1x32xf32> to vector<1x1x32xf32>
    tpu.vector_store %arg6[%385, %c0_109, %c0_110], %388 {strides = array<i32>} : memref<8x1x32xf32, #tpu.memory_space<vmem>>, vector<1x1x32xf32>,
    %c7_i32 = arith.constant 7 : i32
    %cst_111 = arith.constant dense<0.000000e+00> : vector<1x256xf32>
    %389 = tpu.matmul %384, %0, %cst_111 {dimension_numbers = #tpu.dot_dimension_numbers<[1], [0], [0], [1], [0, 0, 1, 1], [], []>} : vector<1x32xf32>, vector<32x256xf32>, vector<1x256xf32> -> vector<1x256xf32>
    %390 = arith.addf %389, %1 : vector<1x256xf32>
    %391 = arith.index_cast %c7_i32 : i32 to index
    %c0_112 = arith.constant 0 : index
    %c0_113 = arith.constant 0 : index
    %392 = vector.load %arg1[%391, %c0_112, %c0_113] : memref<8x1x128xf32, #tpu.memory_space<vmem>>, vector<1x1x128xf32>
    %393 = vector.shape_cast %392 : vector<1x1x128xf32> to vector<1x128xf32>
    %394 = vector.extract_strided_slice %390 {offsets = [0, 0], sizes = [1, 128], strides = [1, 1]} : vector<1x256xf32> to vector<1x128xf32>
    %395 = arith.addf %393, %394 : vector<1x128xf32>
    %cst_114 = arith.constant dense<0xFF800000> : vector<1xf32>
    %396 = vector.multi_reduction <maximumf>, %395, %cst_114 [1] : vector<1x128xf32> to vector<1xf32>
    %397 = vector.shape_cast %396 : vector<1xf32> to vector<1x1xf32>
    %398 = vector.broadcast %397 : vector<1x1xf32> to vector<1x128xf32>
    %399 = arith.subf %395, %398 : vector<1x128xf32>
    %400 = math.exp %399 : vector<1x128xf32>
    %cst_115 = arith.constant dense<0.000000e+00> : vector<1xf32>
    %401 = vector.multi_reduction <add>, %400, %cst_115 [1] : vector<1x128xf32> to vector<1xf32>
    %402 = vector.shape_cast %401 : vector<1xf32> to vector<1x1xf32>
    %403 = vector.broadcast %402 : vector<1x1xf32> to vector<1x128xf32>
    %404 = arith.divf %400, %403 : vector<1x128xf32>
    %405 = arith.index_cast %c7_i32 : i32 to index
    %c0_116 = arith.constant 0 : index
    %c0_117 = arith.constant 0 : index
    %406 = vector.load %arg7[%405, %c0_116, %c0_117] : memref<8x1x128xf32, #tpu.memory_space<vmem>>, vector<1x1x128xf32>
    %407 = vector.shape_cast %406 : vector<1x1x128xf32> to vector<1x128xf32>
    %408 = vector.shape_cast %404 : vector<1x128xf32> to vector<1x1x128xf32>
    tpu.vector_store %arg7[%405, %c0_116, %c0_117], %408 {strides = array<i32>} : memref<8x1x128xf32, #tpu.memory_space<vmem>>, vector<1x1x128xf32>,
    %409 = arith.index_cast %c7_i32 : i32 to index
    %c0_118 = arith.constant 0 : index
    %c0_119 = arith.constant 0 : index
    %410 = vector.load %arg2[%409, %c0_118, %c0_119] : memref<8x1x128xf32, #tpu.memory_space<vmem>>, vector<1x1x128xf32>
    %411 = vector.shape_cast %410 : vector<1x1x128xf32> to vector<1x128xf32>
    %cst_120 = arith.constant dense<0.000000e+00> : vector<1x128xf32>
    %412 = tpu.matmul %404, %2, %cst_120 {dimension_numbers = #tpu.dot_dimension_numbers<[1], [0], [0], [1], [0, 0, 1, 1], [], []>} : vector<1x128xf32>, vector<128x128xf32>, vector<1x128xf32> -> vector<1x128xf32>
    %413 = arith.addf %411, %412 : vector<1x128xf32>
    %414 = vector.extract_strided_slice %413 {offsets = [0, 0], sizes = [1, 32], strides = [1, 1]} : vector<1x128xf32> to vector<1x32xf32>
    %415 = vector.extract_strided_slice %413 {offsets = [0, 32], sizes = [1, 32], strides = [1, 1]} : vector<1x128xf32> to vector<1x32xf32>
    %416 = vector.extract_strided_slice %413 {offsets = [0, 64], sizes = [1, 32], strides = [1, 1]} : vector<1x128xf32> to vector<1x32xf32>
    %417 = vector.extract_strided_slice %390 {offsets = [0, 128], sizes = [1, 32], strides = [1, 1]} : vector<1x256xf32> to vector<1x32xf32>
    %418 = vector.extract_strided_slice %390 {offsets = [0, 160], sizes = [1, 32], strides = [1, 1]} : vector<1x256xf32> to vector<1x32xf32>
    %419 = vector.extract_strided_slice %390 {offsets = [0, 192], sizes = [1, 32], strides = [1, 1]} : vector<1x256xf32> to vector<1x32xf32>
    %420 = arith.addf %414, %417 : vector<1x32xf32>
    %421 = arith.negf %420 : vector<1x32xf32>
    %422 = math.exp %421 : vector<1x32xf32>
    %cst_121 = arith.constant 1.000000e+00 : f32
    %423 = vector.broadcast %cst_121 : f32 to vector<1x32xf32>
    %424 = arith.addf %423, %422 : vector<1x32xf32>
    %425 = arith.divf %423, %424 : vector<1x32xf32>
    %426 = arith.addf %415, %418 : vector<1x32xf32>
    %427 = arith.negf %426 : vector<1x32xf32>
    %428 = math.exp %427 : vector<1x32xf32>
    %cst_122 = arith.constant 1.000000e+00 : f32
    %429 = vector.broadcast %cst_122 : f32 to vector<1x32xf32>
    %430 = arith.addf %429, %428 : vector<1x32xf32>
    %431 = arith.divf %429, %430 : vector<1x32xf32>
    %432 = arith.mulf %425, %419 : vector<1x32xf32>
    %433 = arith.addf %416, %432 : vector<1x32xf32>
    %434 = math.tanh %433 : vector<1x32xf32>
    %cst_123 = arith.constant 1.000000e+00 : f32
    %435 = vector.broadcast %cst_123 : f32 to vector<1x32xf32>
    %436 = arith.subf %435, %431 : vector<1x32xf32>
    %437 = arith.mulf %436, %434 : vector<1x32xf32>
    %438 = arith.mulf %431, %384 : vector<1x32xf32>
    %439 = arith.addf %437, %438 : vector<1x32xf32>
    %440 = arith.index_cast %c7_i32 : i32 to index
    %c0_124 = arith.constant 0 : index
    %c0_125 = arith.constant 0 : index
    %441 = vector.load %arg6[%440, %c0_124, %c0_125] : memref<8x1x32xf32, #tpu.memory_space<vmem>>, vector<1x1x32xf32>
    %442 = vector.shape_cast %441 : vector<1x1x32xf32> to vector<1x32xf32>
    %443 = vector.shape_cast %439 : vector<1x32xf32> to vector<1x1x32xf32>
    tpu.vector_store %arg6[%440, %c0_124, %c0_125], %443 {strides = array<i32>} : memref<8x1x32xf32, #tpu.memory_space<vmem>>, vector<1x1x32xf32>,
    %c8_i32 = arith.constant 8 : i32
    return
  }
}

</mosaic_0001>

<llo_original>
// kernel: attn_decoder_forward.1
$region0: #{attn_decoder_forward.1}
  #allocation0 [shape = 'u32[]', space=smem, size = 0x4, offset = 0x4, fixed_abs, tag = 'smem constant byte address 0x4 - core index']
  #allocation1 [shape = 'u32[144,128]{1,0:T(1,128)}', space=vmem, size = 0x12000, scoped, tag = 'internal scratch']
  %s0 = inlined_call_operand.vmem [shape: f32[1,32], index: 0, kind: input, shape index: {}]
  %s1 = inlined_call_operand.vmem [shape: f32[8,1,128], index: 1, kind: input, shape index: {}]
  %s2 = inlined_call_operand.vmem [shape: f32[8,1,128], index: 2, kind: input, shape index: {}]
  %s3 = inlined_call_operand.vmem [shape: f32[32,256], index: 3, kind: input, shape index: {}]
  %s4 = inlined_call_operand.vmem [shape: f32[1,256], index: 4, kind: input, shape index: {}]
  %s5 = inlined_call_operand.vmem [shape: f32[128,128], index: 5, kind: input, shape index: {}]
  %s6 = inlined_call_operand.vmem [shape: f32[8,1,32], index: 6, kind: output, shape index: {0}]
  %s7 = inlined_call_operand.hbm [shape: f32[8,1,128], index: 7, kind: output, shape index: {1}]
  %8 = xla_tuple %s6, %s7
  %s9 = sld [smem:[#allocation0]]
  $region42: #{attn_decoder_forward.1} parent=0
    _
  %s11 = ssub.s32 1, %s9
  %s12 = scalar_select 0, %s11, %s9
  $region1: #{attn_decoder_forward.1} parent=0
    #allocation2 [shape = 'u8[4096]{0}', space=vmem, size = 0x1000, scoped, tag = 'output window, operand 1, single buffered']
    #allocation3 [shape = 's32[1]{0}', space=sflag, size = 0x4, scoped, tag = 'scoped memory for attn_decoder_forward.1']
    %13 = vsyncpa [#allocation3], 0
    // Predicated region
    $region2: #{attn_decoder_forward.1} parent=1 // pred_check
      _
    $region3: #{attn_decoder_forward.1} parent=1 // pred_check_branch
      %15 = sbr.rel (0) target = $region5
    $region4: #{attn_decoder_forward.1} parent=1 // pred_region
      _
    $region5: #{attn_decoder_forward.1} parent=1 // pred_fallthru
      _
    // Predicated region
    $region6: #{attn_decoder_forward.1} parent=1 // pred_check
      _
    $region7: #{attn_decoder_forward.1} parent=1 // pred_check_branch
      %17 = sbr.rel (0) target = $region9
    $region8: #{attn_decoder_forward.1} parent=1 // pred_region
      _
    $region9: #{attn_decoder_forward.1} parent=1 // pred_fallthru
      _
    // Predicated region
    $region10: #{attn_decoder_forward.1} parent=1 // pred_check
      _
    $region11: #{attn_decoder_forward.1} parent=1 // pred_check_branch
      %19 = sbr.rel (0) target = $region13
    $region12: #{attn_decoder_forward.1} parent=1 // pred_region
      _
    $region13: #{attn_decoder_forward.1} parent=1 // pred_fallthru
      _
    // Predicated region
    $region14: #{attn_decoder_forward.1} parent=1 // pred_check
      _
    $region15: #{attn_decoder_forward.1} parent=1 // pred_check_branch
      %21 = sbr.rel (0) target = $region17
    $region16: #{attn_decoder_forward.1} parent=1 // pred_region
      _
    $region17: #{attn_decoder_forward.1} parent=1 // pred_fallthru
      _
    // Predicated region
    $region18: #{attn_decoder_forward.1} parent=1 // pred_check
      _
    $region19: #{attn_decoder_forward.1} parent=1 // pred_check_branch
      %23 = sbr.rel (0) target = $region21
    $region20: #{attn_decoder_forward.1} parent=1 // pred_region
      _
    $region21: #{attn_decoder_forward.1} parent=1 // pred_fallthru
      _
    // Predicated region
    $region22: #{attn_decoder_forward.1} parent=1 // pred_check
      _
    $region23: #{attn_decoder_forward.1} parent=1 // pred_check_branch
      %25 = sbr.rel (0) target = $region25
    $region24: #{attn_decoder_forward.1} parent=1 // pred_region
      _
    $region25: #{attn_decoder_forward.1} parent=1 // pred_fallthru
      _
    %v26 = vld [vmem:[%s3] sm:$0xff]
    %v27 = vld [vmem:[%s3 + $0x8] sm:$0xff]
    %v28 = vld [vmem:[%s3 + $0x10] sm:$0xff]
    %v29 = vld [vmem:[%s3 + $0x18] sm:$0xff]
    %v30 = vld [vmem:[%s3 + $0x20] sm:$0xff]
    %v31 = vld [vmem:[%s3 + $0x28] sm:$0xff]
    %v32 = vld [vmem:[%s3 + $0x30] sm:$0xff]
    %v33 = vld [vmem:[%s3 + $0x38] sm:$0xff]
    %v34 = vld [vmem:[%s4] sm:$0x3]
    %v35 = vld [vmem:[%s5] sm:$0xff]
    %v36 = vld [vmem:[%s5 + $0x8] sm:$0xff]
    %v37 = vld [vmem:[%s5 + $0x10] sm:$0xff]
    %v38 = vld [vmem:[%s5 + $0x18] sm:$0xff]
    %v39 = vld [vmem:[%s5 + $0x20] sm:$0xff]
    %v40 = vld [vmem:[%s5 + $0x28] sm:$0xff]
    %v41 = vld [vmem:[%s5 + $0x30] sm:$0xff]
    %v42 = vld [vmem:[%s5 + $0x38] sm:$0xff]
    %v43 = vld [vmem:[%s5 + $0x40] sm:$0xff]
    %v44 = vld [vmem:[%s5 + $0x48] sm:$0xff]
    %v45 = vld [vmem:[%s5 + $0x50] sm:$0xff]
    %v46 = vld [vmem:[%s5 + $0x58] sm:$0xff]
    %v47 = vld [vmem:[%s5 + $0x60] sm:$0xff]
    %v48 = vld [vmem:[%s5 + $0x68] sm:$0xff]
    %v49 = vld [vmem:[%s5 + $0x70] sm:$0xff]
    %v50 = vld [vmem:[%s5 + $0x78] sm:$0xff]
    %v51 = vld [vmem:[%s0] sm:$0x1]
    %v53 = vlaneseq
    %v54 = vshrl.u32 %v53, 7
    %v55 = vsub.s32 0, %v54
    %v56 = vrot.slane %v34, %v55
    %v57 = vlaneseq
    %v58 = vshrl.u32 %v57, 7
    %v59 = vsub.s32 1, %v58
    %v60 = vrot.slane %v34, %v59
    %vm63 = vcmask 261120
    %v65 = vsel %vm63, %v51, 0
    %67 = vmatprep.subr.mxu0 0.0
    %68 = vmatpush1.msra.mxu0 0.0
    %69 = vmatprep.subr.mxu0 0.0
    %70 = vmatpush1.msra.mxu0 0.0
    %71 = vmatprep.subr.mxu0 0.0
    %72 = vmatpush1.msra.mxu0 0.0
    %73 = vmatprep.subr.mxu0 0.0
    %74 = vmatpush1.msra.mxu0 0.0
    %75 = vmatprep.subr.mxu0 0.0
    %76 = vmatpush1.msra.mxu0 0.0
    %77 = vmatprep.subr.mxu0 0.0
    %78 = vmatpush1.msra.mxu0 0.0
    %79 = vmatprep.subr.mxu0 0.0
    %80 = vmatpush1.msra.mxu0 0.0
    %81 = vmatprep.subr.mxu0 0.0
    %82 = vmatpush1.msra.mxu0 0.0
    %83 = vmatprep.subr.mxu0 0.0
    %84 = vmatpush1.msra.mxu0 0.0
    %85 = vmatprep.subr.mxu0 0.0
    %86 = vmatpush1.msra.mxu0 0.0
    %87 = vmatprep.subr.mxu0 0.0
    %88 = vmatpush1.msra.mxu0 0.0
    %89 = vmatprep.subr.mxu0 0.0
    %90 = vmatpush1.msra.mxu0 0.0
    %91 = vmatprep.subr.mxu0 %v33
    %92 = vmatpush1.msra.mxu0 %v32
    %93 = vmatprep.subr.mxu0 %v31
    %94 = vmatpush1.msra.mxu0 %v30
    %95 = vmatprep.subr.mxu0 %v29
    %96 = vmatpush1.msra.mxu0 %v28
    %97 = vmatprep.subr.mxu0 %v27
    %98 = vmatpush1.msra.mxu0 %v26
    %99 = vmatprep.subr.mxu0 0.0
    %100 = vmatpush2.msra.mxu0 0.0
    %101 = vmatprep.subr.mxu0 0.0
    %102 = vmatpush2.msra.mxu0 0.0
    %103 = vmatprep.subr.mxu0 0.0
    %104 = vmatpush2.msra.mxu0 0.0
    %105 = vmatprep.subr.mxu0 0.0
    %106 = vmatpush2.msra.mxu0 0.0
    %107 = vmatprep.subr.mxu0 0.0
    %108 = vmatpush2.msra.mxu0 0.0
    %109 = vmatprep.subr.mxu0 0.0
    %110 = vmatpush2.msra.mxu0 0.0
    %111 = vmatprep.subr.mxu0 0.0
    %112 = vmatpush2.msra.mxu0 0.0
    %113 = vmatprep.subr.mxu0 0.0
    %114 = vmatpush2.msra.mxu0 0.0
    %115 = vmatprep.subr.mxu0 0.0
    %116 = vmatpush2.msra.mxu0 0.0
    %117 = vmatprep.subr.mxu0 0.0
    %118 = vmatpush2.msra.mxu0 0.0
    %119 = vmatprep.subr.mxu0 0.0
    %120 = vmatpush2.msra.mxu0 0.0
    %121 = vmatprep.subr.mxu0 0.0
    %122 = vmatpush2.msra.mxu0 0.0
    %123 = vmatprep.subr.mxu0 0.0
    %124 = vmatpush2.msra.mxu0 0.0
    %125 = vmatprep.subr.mxu0 0.0
    %126 = vmatpush2.msra.mxu0 0.0
    %127 = vmatprep.subr.mxu0 0.0
    %128 = vmatpush2.msra.mxu0 0.0
    %129 = vmatprep.subr.mxu0 0.0
    %130 = vmatpush2.msra.mxu0 0.0
    %131 = vmatprep.mubr.f32.mxu0 0.0
    %132 = vmatmul.mubr.f32.gmra.mxu0 %v65
    %v133 = vpop.f32.mrf.mxu0
    %v134 = vadd.f32 %v56, %v133
    %v135 = vpop.f32.mrf.mxu0
    %v136 = vadd.f32 %v60, %v135
    %137 = vdwg.mxu0
    %v138 = vld [vmem:[%s1] sm:$0x1]
    %v139 = vadd.f32 %v138, %v134
    %vm140 = vcmask 1040384
    %v141 = vsel %vm140, %v139, -inf
    %142 = vmax.xlane.f32.xlu0 %v141
    %v143 = vpop.xlane.xlu0 %142
    %v144 = vsub.f32 %v139, %v143
    %v145 = vmul.f32 %v144, 1.442695
    %v146 = vpow.pop %v145
    %v147 = vsel %vm140, %v146, 0.0
    %148 = vadd.xlane.f32.xlu0 %v147
    %v149 = vpop.xlane.xlu0 %148
    %v150 = vrcp.pop %v149
    %v151 = vmul.f32 %v146, %v150
    %152 = vst [vmem:[#allocation2] sm:$0x1] %v151
    %v153 = vld [vmem:[%s2] sm:$0x1]
    %154 = vmatprep.subr.mxu0 0.0
    %155 = vmatpush1.msra.mxu0 %v50
    %156 = vmatprep.subr.mxu0 0.0
    %157 = vmatpush1.msra.mxu0 %v49
    %158 = vmatprep.subr.mxu0 0.0
    %159 = vmatpush1.msra.mxu0 %v48
    %160 = vmatprep.subr.mxu0 0.0
    %161 = vmatpush1.msra.mxu0 %v47
    %162 = vmatprep.subr.mxu0 0.0
    %163 = vmatpush1.msra.mxu0 %v46
    %164 = vmatprep.subr.mxu0 0.0
    %165 = vmatpush1.msra.mxu0 %v45
    %166 = vmatprep.subr.mxu0 0.0
    %167 = vmatpush1.msra.mxu0 %v44
    %168 = vmatprep.subr.mxu0 0.0
    %169 = vmatpush1.msra.mxu0 %v43
    %170 = vmatprep.subr.mxu0 0.0
    %171 = vmatpush1.msra.mxu0 %v42
    %172 = vmatprep.subr.mxu0 0.0
    %173 = vmatpush1.msra.mxu0 %v41
    %174 = vmatprep.subr.mxu0 0.0
    %175 = vmatpush1.msra.mxu0 %v40
    %176 = vmatprep.subr.mxu0 0.0
    %177 = vmatpush1.msra.mxu0 %v39
    %178 = vmatprep.subr.mxu0 0.0
    %179 = vmatpush1.msra.mxu0 %v38
    %180 = vmatprep.subr.mxu0 0.0
    %181 = vmatpush1.msra.mxu0 %v37
    %182 = vmatprep.subr.mxu0 0.0
    %183 = vmatpush1.msra.mxu0 %v36
    %184 = vmatprep.subr.mxu0 0.0
    %185 = vmatpush1.msra.mxu0 %v35
    %186 = vmatprep.subr.mxu0 0.0
    %187 = vmatpush2.msra.mxu0 0.0
    %188 = vmatprep.subr.mxu0 0.0
    %189 = vmatpush2.msra.mxu0 0.0
    %190 = vmatprep.subr.mxu0 0.0
    %191 = vmatpush2.msra.mxu0 0.0
    %192 = vmatprep.subr.mxu0 0.0
    %193 = vmatpush2.msra.mxu0 0.0
    %194 = vmatprep.subr.mxu0 0.0
    %195 = vmatpush2.msra.mxu0 0.0
    %196 = vmatprep.subr.mxu0 0.0
    %197 = vmatpush2.msra.mxu0 0.0
    %198 = vmatprep.subr.mxu0 0.0
    %199 = vmatpush2.msra.mxu0 0.0
    %200 = vmatprep.subr.mxu0 0.0
    %201 = vmatpush2.msra.mxu0 0.0
    %202 = vmatprep.subr.mxu0 0.0
    %203 = vmatpush2.msra.mxu0 0.0
    %204 = vmatprep.subr.mxu0 0.0
    %205 = vmatpush2.msra.mxu0 0.0
    %206 = vmatprep.subr.mxu0 0.0
    %207 = vmatpush2.msra.mxu0 0.0
    %208 = vmatprep.subr.mxu0 0.0
    %209 = vmatpush2.msra.mxu0 0.0
    %210 = vmatprep.subr.mxu0 0.0
    %211 = vmatpush2.msra.mxu0 0.0
    %212 = vmatprep.subr.mxu0 0.0
    %213 = vmatpush2.msra.mxu0 0.0
    %214 = vmatprep.subr.mxu0 0.0
    %215 = vmatpush2.msra.mxu0 0.0
    %216 = vmatprep.subr.mxu0 0.0
    %217 = vmatpush2.msra.mxu0 0.0
    %218 = vmatprep.mubr.f32.mxu0 0.0
    %219 = vmatmul.mubr.f32.gmra.mxu0 %v151
    %v220 = vpop.f32.mrf.mxu0
    %v221 = vadd.f32 0.0, %v220
    %v222 = vpop.f32.mrf.mxu0
    %223 = vdwg.mxu0
    %v224 = vadd.f32 %v153, %v221
    %v225 = vadd.f32 %v224, %v136
    %v226 = vxor.u32 %v225, 2147483648
    %v227 = vmul.f32 %v226, 1.442695
    %v228 = vpow.pop %v227
    %v229 = vadd.f32 %v228, 1.0
    %v230 = vrcp.pop %v229
    %v231 = vmul.f32 1.0, %v230
    %v234 = vunpack.c.l.s4 1966171168
    %v235 = vunpack.c.0.s8 %v234
    %v236 = vlaneseq
    %v237 = vshrl.u32 %v236, 7
    %v238 = vsub.s32 %v235, %v237
    %v239 = vrot.slane %v136, %v238
    %v241 = vunpack.c.l.s4 1966171168
    %v242 = vunpack.c.0.s8 %v241
    %v243 = vlaneseq
    %v244 = vshrl.u32 %v243, 7
    %v245 = vsub.s32 %v242, %v244
    %v246 = vrot.slane %v239, %v245
    %247 = vrot.lane.b32.xlu0 %v246, 64
    %v248 = vpop.permute.xlu0 %247
    %v250 = vmul.f32 %v231, %v248
    %252 = vrot.lane.b32.xlu0 %v250, 64
    %v253 = vpop.permute.xlu0 %252
    %v255 = vadd.f32 %v224, %v253
    %v256 = vtanh.pop %v255
    %v257 = vsub.f32 1.0, %v231
    %259 = vrot.lane.b32.xlu0 %v256, 96
    %v260 = vpop.permute.xlu0 %259
    %v262 = vmul.f32 %v257, %v260
    %263 = vrot.lane.b32.xlu0 %v51, 32
    %v264 = vpop.permute.xlu0 %263
    %v266 = vmul.f32 %v231, %v264
    %v267 = vadd.f32 %v262, %v266
    %v269 = vlaneseq
    %v270 = vshrl.u32 %v269, 7
    %v271 = vsub.s32 0, %v270
    %v272 = vrot.slane %v267, %v271
    %273 = vrot.lane.b32.xlu0 %v272, 96
    %v274 = vpop.permute.xlu0 %273
    %vm276 = vcmask 253952
    %277 = vst.msk [vmem:[%s6] sm:$0x1] %vm276, %v274
    %v278 = vsel %vm63, %v274, 0
    %280 = vmatprep.subr.mxu0 0.0
    %281 = vmatpush1.msra.mxu0 0.0
    %282 = vmatprep.subr.mxu0 0.0
    %283 = vmatpush1.msra.mxu0 0.0
    %284 = vmatprep.subr.mxu0 0.0
    %285 = vmatpush1.msra.mxu0 0.0
    %286 = vmatprep.subr.mxu0 0.0
    %287 = vmatpush1.msra.mxu0 0.0
    %288 = vmatprep.subr.mxu0 0.0
    %289 = vmatpush1.msra.mxu0 0.0
    %290 = vmatprep.subr.mxu0 0.0
    %291 = vmatpush1.msra.mxu0 0.0
    %292 = vmatprep.subr.mxu0 0.0
    %293 = vmatpush1.msra.mxu0 0.0
    %294 = vmatprep.subr.mxu0 0.0
    %295 = vmatpush1.msra.mxu0 0.0
    %296 = vmatprep.subr.mxu0 0.0
    %297 = vmatpush1.msra.mxu0 0.0
    %298 = vmatprep.subr.mxu0 0.0
    %299 = vmatpush1.msra.mxu0 0.0
    %300 = vmatprep.subr.mxu0 0.0
    %301 = vmatpush1.msra.mxu0 0.0
    %302 = vmatprep.subr.mxu0 0.0
    %303 = vmatpush1.msra.mxu0 0.0
    %304 = vmatprep.subr.mxu0 %v33
    %305 = vmatpush1.msra.mxu0 %v32
    %306 = vmatprep.subr.mxu0 %v31
    %307 = vmatpush1.msra.mxu0 %v30
    %308 = vmatprep.subr.mxu0 %v29
    %309 = vmatpush1.msra.mxu0 %v28
    %310 = vmatprep.subr.mxu0 %v27
    %311 = vmatpush1.msra.mxu0 %v26
    %312 = vmatprep.subr.mxu0 0.0
    %313 = vmatpush2.msra.mxu0 0.0
    %314 = vmatprep.subr.mxu0 0.0
    %315 = vmatpush2.msra.mxu0 0.0
    %316 = vmatprep.subr.mxu0 0.0
    %317 = vmatpush2.msra.mxu0 0.0
    %318 = vmatprep.subr.mxu0 0.0
    %319 = vmatpush2.msra.mxu0 0.0
    %320 = vmatprep.subr.mxu0 0.0
    %321 = vmatpush2.msra.mxu0 0.0
    %322 = vmatprep.subr.mxu0 0.0
    %323 = vmatpush2.msra.mxu0 0.0
    %324 = vmatprep.subr.mxu0 0.0
    %325 = vmatpush2.msra.mxu0 0.0
    %326 = vmatprep.subr.mxu0 0.0
    %327 = vmatpush2.msra.mxu0 0.0
    %328 = vmatprep.subr.mxu0 0.0
    %329 = vmatpush2.msra.mxu0 0.0
    %330 = vmatprep.subr.mxu0 0.0
    %331 = vmatpush2.msra.mxu0 0.0
    %332 = vmatprep.subr.mxu0 0.0
    %333 = vmatpush2.msra.mxu0 0.0
    %334 = vmatprep.subr.mxu0 0.0
    %335 = vmatpush2.msra.mxu0 0.0
    %336 = vmatprep.subr.mxu0 0.0
    %337 = vmatpush2.msra.mxu0 0.0
    %338 = vmatprep.subr.mxu0 0.0
    %339 = vmatpush2.msra.mxu0 0.0
    %340 = vmatprep.subr.mxu0 0.0
    %341 = vmatpush2.msra.mxu0 0.0
    %342 = vmatprep.subr.mxu0 0.0
    %343 = vmatpush2.msra.mxu0 0.0
    %344 = vmatprep.mubr.f32.mxu0 0.0
    %345 = vmatmul.mubr.f32.gmra.mxu0 %v278
    %v346 = vpop.f32.mrf.mxu0
    %v347 = vadd.f32 %v56, %v346
    %v348 = vpop.f32.mrf.mxu0
    %v349 = vadd.f32 %v60, %v348
    %350 = vdwg.mxu0
    %s351 = scalar_lea.vmem %s1, 1
    %v352 = vld [vmem:[%s351] sm:$0x1]
    %v353 = vadd.f32 %v352, %v347
    %v354 = vsel %vm140, %v353, -inf
    %355 = vmax.xlane.f32.xlu0 %v354
    %v356 = vpop.xlane.xlu0 %355
    %v357 = vsub.f32 %v353, %v356
    %v358 = vmul.f32 %v357, 1.442695
    %v359 = vpow.pop %v358
    %v360 = vsel %vm140, %v359, 0.0
    %361 = vadd.xlane.f32.xlu0 %v360
    %v362 = vpop.xlane.xlu0 %361
    %v363 = vrcp.pop %v362
    %v364 = vmul.f32 %v359, %v363
    %s365 = scalar_lea.vmem [#allocation2], 1
    %366 = vst [vmem:[%s365] sm:$0x1] %v364
    %s367 = scalar_lea.vmem %s2, 1
    %v368 = vld [vmem:[%s367] sm:$0x1]
    %369 = vmatprep.subr.mxu0 0.0
    %370 = vmatpush1.msra.mxu0 %v50
    %371 = vmatprep.subr.mxu0 0.0
    %372 = vmatpush1.msra.mxu0 %v49
    %373 = vmatprep.subr.mxu0 0.0
    %374 = vmatpush1.msra.mxu0 %v48
    %375 = vmatprep.subr.mxu0 0.0
    %376 = vmatpush1.msra.mxu0 %v47
    %377 = vmatprep.subr.mxu0 0.0
    %378 = vmatpush1.msra.mxu0 %v46
    %379 = vmatprep.subr.mxu0 0.0
    %380 = vmatpush1.msra.mxu0 %v45
    %381 = vmatprep.subr.mxu0 0.0
    %382 = vmatpush1.msra.mxu0 %v44
    %383 = vmatprep.subr.mxu0 0.0
    %384 = vmatpush1.msra.mxu0 %v43
    %385 = vmatprep.subr.mxu0 0.0
    %386 = vmatpush1.msra.mxu0 %v42
    %387 = vmatprep.subr.mxu0 0.0
    %388 = vmatpush1.msra.mxu0 %v41
    %389 = vmatprep.subr.mxu0 0.0
    %390 = vmatpush1.msra.mxu0 %v40
    %391 = vmatprep.subr.mxu0 0.0
    %392 = vmatpush1.msra.mxu0 %v39
    %393 = vmatprep.subr.mxu0 0.0
    %394 = vmatpush1.msra.mxu0 %v38
    %395 = vmatprep.subr.mxu0 0.0
    %396 = vmatpush1.msra.mxu0 %v37
    %397 = vmatprep.subr.mxu0 0.0
    %398 = vmatpush1.msra.mxu0 %v36
    %399 = vmatprep.subr.mxu0 0.0
    %400 = vmatpush1.msra.mxu0 %v35
    %401 = vmatprep.subr.mxu0 0.0
    %402 = vmatpush2.msra.mxu0 0.0
    %403 = vmatprep.subr.mxu0 0.0
    %404 = vmatpush2.msra.mxu0 0.0
    %405 = vmatprep.subr.mxu0 0.0
    %406 = vmatpush2.msra.mxu0 0.0
    %407 = vmatprep.subr.mxu0 0.0
    %408 = vmatpush2.msra.mxu0 0.0
    %409 = vmatprep.subr.mxu0 0.0
    %410 = vmatpush2.msra.mxu0 0.0
    %411 = vmatprep.subr.mxu0 0.0
    %412 = vmatpush2.msra.mxu0 0.0
    %413 = vmatprep.subr.mxu0 0.0
    %414 = vmatpush2.msra.mxu0 0.0
    %415 = vmatprep.subr.mxu0 0.0
    %416 = vmatpush2.msra.mxu0 0.0
    %417 = vmatprep.subr.mxu0 0.0
    %418 = vmatpush2.msra.mxu0 0.0
    %419 = vmatprep.subr.mxu0 0.0
    %420 = vmatpush2.msra.mxu0 0.0
    %421 = vmatprep.subr.mxu0 0.0
    %422 = vmatpush2.msra.mxu0 0.0
    %423 = vmatprep.subr.mxu0 0.0
    %424 = vmatpush2.msra.mxu0 0.0
    %425 = vmatprep.subr.mxu0 0.0
    %426 = vmatpush2.msra.mxu0 0.0
    %427 = vmatprep.subr.mxu0 0.0
    %428 = vmatpush2.msra.mxu0 0.0
    %429 = vmatprep.subr.mxu0 0.0
    %430 = vmatpush2.msra.mxu0 0.0
    %431 = vmatprep.subr.mxu0 0.0
    %432 = vmatpush2.msra.mxu0 0.0
    %433 = vmatprep.mubr.f32.mxu0 0.0
    %434 = vmatmul.mubr.f32.gmra.mxu0 %v364
    %v435 = vpop.f32.mrf.mxu0
    %v436 = vadd.f32 0.0, %v435
    %v437 = vpop.f32.mrf.mxu0
    %438 = vdwg.mxu0
    %v439 = vadd.f32 %v368, %v436
    %v440 = vadd.f32 %v439, %v349
    %v441 = vxor.u32 %v440, 2147483648
    %v442 = vmul.f32 %v441, 1.442695
    %v443 = vpow.pop %v442
    %v444 = vadd.f32 %v443, 1.0
    %v445 = vrcp.pop %v444
    %v446 = vmul.f32 1.0, %v445
    %v449 = vunpack.c.l.s4 1966171168
    %v450 = vunpack.c.0.s8 %v449
    %v451 = vlaneseq
    %v452 = vshrl.u32 %v451, 7
    %v453 = vsub.s32 %v450, %v452
    %v454 = vrot.slane %v349, %v453
    %v456 = vunpack.c.l.s4 1966171168
    %v457 = vunpack.c.0.s8 %v456
    %v458 = vlaneseq
    %v459 = vshrl.u32 %v458, 7
    %v460 = vsub.s32 %v457, %v459
    %v461 = vrot.slane %v454, %v460
    %462 = vrot.lane.b32.xlu0 %v461, 64
    %v463 = vpop.permute.xlu0 %462
    %v465 = vmul.f32 %v446, %v463
    %467 = vrot.lane.b32.xlu0 %v465, 64
    %v468 = vpop.permute.xlu0 %467
    %v470 = vadd.f32 %v439, %v468
    %v471 = vtanh.pop %v470
    %v472 = vsub.f32 1.0, %v446
    %474 = vrot.lane.b32.xlu0 %v471, 96
    %v475 = vpop.permute.xlu0 %474
    %v477 = vmul.f32 %v472, %v475
    %v478 = vmul.f32 %v446, %v267
    %v479 = vadd.f32 %v477, %v478
    %v481 = vlaneseq
    %v482 = vshrl.u32 %v481, 7
    %v483 = vsub.s32 0, %v482
    %v484 = vrot.slane %v479, %v483
    %485 = vrot.lane.b32.xlu0 %v484, 96
    %v486 = vpop.permute.xlu0 %485
    %s488 = scalar_lea.vmem %s6, 1
    %489 = vst.msk [vmem:[%s488] sm:$0x1] %vm276, %v486
    %v490 = vsel %vm63, %v486, 0
    %492 = vmatprep.subr.mxu0 0.0
    %493 = vmatpush1.msra.mxu0 0.0
    %494 = vmatprep.subr.mxu0 0.0
    %495 = vmatpush1.msra.mxu0 0.0
    %496 = vmatprep.subr.mxu0 0.0
    %497 = vmatpush1.msra.mxu0 0.0
    %498 = vmatprep.subr.mxu0 0.0
    %499 = vmatpush1.msra.mxu0 0.0
    %500 = vmatprep.subr.mxu0 0.0
    %501 = vmatpush1.msra.mxu0 0.0
    %502 = vmatprep.subr.mxu0 0.0
    %503 = vmatpush1.msra.mxu0 0.0
    %504 = vmatprep.subr.mxu0 0.0
    %505 = vmatpush1.msra.mxu0 0.0
    %506 = vmatprep.subr.mxu0 0.0
    %507 = vmatpush1.msra.mxu0 0.0
    %508 = vmatprep.subr.mxu0 0.0
    %509 = vmatpush1.msra.mxu0 0.0
    %510 = vmatprep.subr.mxu0 0.0
    %511 = vmatpush1.msra.mxu0 0.0
    %512 = vmatprep.subr.mxu0 0.0
    %513 = vmatpush1.msra.mxu0 0.0
    %514 = vmatprep.subr.mxu0 0.0
    %515 = vmatpush1.msra.mxu0 0.0
    %516 = vmatprep.subr.mxu0 %v33
    %517 = vmatpush1.msra.mxu0 %v32
    %518 = vmatprep.subr.mxu0 %v31
    %519 = vmatpush1.msra.mxu0 %v30
    %520 = vmatprep.subr.mxu0 %v29
    %521 = vmatpush1.msra.mxu0 %v28
    %522 = vmatprep.subr.mxu0 %v27
    %523 = vmatpush1.msra.mxu0 %v26
    %524 = vmatprep.subr.mxu0 0.0
    %525 = vmatpush2.msra.mxu0 0.0
    %526 = vmatprep.subr.mxu0 0.0
    %527 = vmatpush2.msra.mxu0 0.0
    %528 = vmatprep.subr.mxu0 0.0
    %529 = vmatpush2.msra.mxu0 0.0
    %530 = vmatprep.subr.mxu0 0.0
    %531 = vmatpush2.msra.mxu0 0.0
    %532 = vmatprep.subr.mxu0 0.0
    %533 = vmatpush2.msra.mxu0 0.0
    %534 = vmatprep.subr.mxu0 0.0
    %535 = vmatpush2.msra.mxu0 0.0
    %536 = vmatprep.subr.mxu0 0.0
    %537 = vmatpush2.msra.mxu0 0.0
    %538 = vmatprep.subr.mxu0 0.0
    %539 = vmatpush2.msra.mxu0 0.0
    %540 = vmatprep.subr.mxu0 0.0
    %541 = vmatpush2.msra.mxu0 0.0
    %542 = vmatprep.subr.mxu0 0.0
    %543 = vmatpush2.msra.mxu0 0.0
    %544 = vmatprep.subr.mxu0 0.0
    %545 = vmatpush2.msra.mxu0 0.0
    %546 = vmatprep.subr.mxu0 0.0
    %547 = vmatpush2.msra.mxu0 0.0
    %548 = vmatprep.subr.mxu0 0.0
    %549 = vmatpush2.msra.mxu0 0.0
    %550 = vmatprep.subr.mxu0 0.0
    %551 = vmatpush2.msra.mxu0 0.0
    %552 = vmatprep.subr.mxu0 0.0
    %553 = vmatpush2.msra.mxu0 0.0
    %554 = vmatprep.subr.mxu0 0.0
    %555 = vmatpush2.msra.mxu0 0.0
    %556 = vmatprep.mubr.f32.mxu0 0.0
    %557 = vmatmul.mubr.f32.gmra.mxu0 %v490
    %v558 = vpop.f32.mrf.mxu0
    %v559 = vadd.f32 %v56, %v558
    %v560 = vpop.f32.mrf.mxu0
    %v561 = vadd.f32 %v60, %v560
    %562 = vdwg.mxu0
    %s563 = scalar_lea.vmem %s1, 2
    %v564 = vld [vmem:[%s563] sm:$0x1]
    %v565 = vadd.f32 %v564, %v559
    %v566 = vsel %vm140, %v565, -inf
    %567 = vmax.xlane.f32.xlu0 %v566
    %v568 = vpop.xlane.xlu0 %567
    %v569 = vsub.f32 %v565, %v568
    %v570 = vmul.f32 %v569, 1.442695
    %v571 = vpow.pop %v570
    %v572 = vsel %vm140, %v571, 0.0
    %573 = vadd.xlane.f32.xlu0 %v572
    %v574 = vpop.xlane.xlu0 %573
    %v575 = vrcp.pop %v574
    %v576 = vmul.f32 %v571, %v575
    %s577 = scalar_lea.vmem [#allocation2], 2
    %578 = vst [vmem:[%s577] sm:$0x1] %v576
    %s579 = scalar_lea.vmem %s2, 2
    %v580 = vld [vmem:[%s579] sm:$0x1]
    %581 = vmatprep.subr.mxu0 0.0
    %582 = vmatpush1.msra.mxu0 %v50
    %583 = vmatprep.subr.mxu0 0.0
    %584 = vmatpush1.msra.mxu0 %v49
    %585 = vmatprep.subr.mxu0 0.0
    %586 = vmatpush1.msra.mxu0 %v48
    %587 = vmatprep.subr.mxu0 0.0
    %588 = vmatpush1.msra.mxu0 %v47
    %589 = vmatprep.subr.mxu0 0.0
    %590 = vmatpush1.msra.mxu0 %v46
    %591 = vmatprep.subr.mxu0 0.0
    %592 = vmatpush1.msra.mxu0 %v45
    %593 = vmatprep.subr.mxu0 0.0
    %594 = vmatpush1.msra.mxu0 %v44
    %595 = vmatprep.subr.mxu0 0.0
    %596 = vmatpush1.msra.mxu0 %v43
    %597 = vmatprep.subr.mxu0 0.0
    %598 = vmatpush1.msra.mxu0 %v42
    %599 = vmatprep.subr.mxu0 0.0
    %600 = vmatpush1.msra.mxu0 %v41
    %601 = vmatprep.subr.mxu0 0.0
    %602 = vmatpush1.msra.mxu0 %v40
    %603 = vmatprep.subr.mxu0 0.0
    %604 = vmatpush1.msra.mxu0 %v39
    %605 = vmatprep.subr.mxu0 0.0
    %606 = vmatpush1.msra.mxu0 %v38
    %607 = vmatprep.subr.mxu0 0.0
    %608 = vmatpush1.msra.mxu0 %v37
    %609 = vmatprep.subr.mxu0 0.0
    %610 = vmatpush1.msra.mxu0 %v36
    %611 = vmatprep.subr.mxu0 0.0
    %612 = vmatpush1.msra.mxu0 %v35
    %613 = vmatprep.subr.mxu0 0.0
    %614 = vmatpush2.msra.mxu0 0.0
    %615 = vmatprep.subr.mxu0 0.0
    %616 = vmatpush2.msra.mxu0 0.0
    %617 = vmatprep.subr.mxu0 0.0
    %618 = vmatpush2.msra.mxu0 0.0
    %619 = vmatprep.subr.mxu0 0.0
    %620 = vmatpush2.msra.mxu0 0.0
    %621 = vmatprep.subr.mxu0 0.0
    %622 = vmatpush2.msra.mxu0 0.0
    %623 = vmatprep.subr.mxu0 0.0
    %624 = vmatpush2.msra.mxu0 0.0
    %625 = vmatprep.subr.mxu0 0.0
    %626 = vmatpush2.msra.mxu0 0.0
    %627 = vmatprep.subr.mxu0 0.0
    %628 = vmatpush2.msra.mxu0 0.0
    %629 = vmatprep.subr.mxu0 0.0
    %630 = vmatpush2.msra.mxu0 0.0
    %631 = vmatprep.subr.mxu0 0.0
    %632 = vmatpush2.msra.mxu0 0.0
    %633 = vmatprep.subr.mxu0 0.0
    %634 = vmatpush2.msra.mxu0 0.0
    %635 = vmatprep.subr.mxu0 0.0
    %636 = vmatpush2.msra.mxu0 0.0
    %637 = vmatprep.subr.mxu0 0.0
    %638 = vmatpush2.msra.mxu0 0.0
    %639 = vmatprep.subr.mxu0 0.0
    %640 = vmatpush2.msra.mxu0 0.0
    %641 = vmatprep.subr.mxu0 0.0
    %642 = vmatpush2.msra.mxu0 0.0
    %643 = vmatprep.subr.mxu0 0.0
    %644 = vmatpush2.msra.mxu0 0.0
    %645 = vmatprep.mubr.f32.mxu0 0.0
    %646 = vmatmul.mubr.f32.gmra.mxu0 %v576
    %v647 = vpop.f32.mrf.mxu0
    %v648 = vadd.f32 0.0, %v647
    %v649 = vpop.f32.mrf.mxu0
    %650 = vdwg.mxu0
    %v651 = vadd.f32 %v580, %v648
    %v652 = vadd.f32 %v651, %v561
    %v653 = vxor.u32 %v652, 2147483648
    %v654 = vmul.f32 %v653, 1.442695
    %v655 = vpow.pop %v654
    %v656 = vadd.f32 %v655, 1.0
    %v657 = vrcp.pop %v656
    %v658 = vmul.f32 1.0, %v657
    %v661 = vunpack.c.l.s4 1966171168
    %v662 = vunpack.c.0.s8 %v661
    %v663 = vlaneseq
    %v664 = vshrl.u32 %v663, 7
    %v665 = vsub.s32 %v662, %v664
    %v666 = vrot.slane %v561, %v665
    %v668 = vunpack.c.l.s4 1966171168
    %v669 = vunpack.c.0.s8 %v668
    %v670 = vlaneseq
    %v671 = vshrl.u32 %v670, 7
    %v672 = vsub.s32 %v669, %v671
    %v673 = vrot.slane %v666, %v672
    %674 = vrot.lane.b32.xlu0 %v673, 64
    %v675 = vpop.permute.xlu0 %674
    %v677 = vmul.f32 %v658, %v675
    %679 = vrot.lane.b32.xlu0 %v677, 64
    %v680 = vpop.permute.xlu0 %679
    %v682 = vadd.f32 %v651, %v680
    %v683 = vtanh.pop %v682
    %v684 = vsub.f32 1.0, %v658
    %686 = vrot.lane.b32.xlu0 %v683, 96
    %v687 = vpop.permute.xlu0 %686
    %v689 = vmul.f32 %v684, %v687
    %v690 = vmul.f32 %v658, %v479
    %v691 = vadd.f32 %v689, %v690
    %v693 = vlaneseq
    %v694 = vshrl.u32 %v693, 7
    %v695 = vsub.s32 0, %v694
    %v696 = vrot.slane %v691, %v695
    %697 = vrot.lane.b32.xlu0 %v696, 96
    %v698 = vpop.permute.xlu0 %697
    %s700 = scalar_lea.vmem %s6, 2
    %701 = vst.msk [vmem:[%s700] sm:$0x1] %vm276, %v698
    %v702 = vsel %vm63, %v698, 0
    %704 = vmatprep.subr.mxu0 0.0
    %705 = vmatpush1.msra.mxu0 0.0
    %706 = vmatprep.subr.mxu0 0.0
    %707 = vmatpush1.msra.mxu0 0.0
    %708 = vmatprep.subr.mxu0 0.0
    %709 = vmatpush1.msra.mxu0 0.0
    %710 = vmatprep.subr.mxu0 0.0
    %711 = vmatpush1.msra.mxu0 0.0
    %712 = vmatprep.subr.mxu0 0.0
    %713 = vmatpush1.msra.mxu0 0.0
    %714 = vmatprep.subr.mxu0 0.0
    %715 = vmatpush1.msra.mxu0 0.0
    %716 = vmatprep.subr.mxu0 0.0
    %717 = vmatpush1.msra.mxu0 0.0
    %718 = vmatprep.subr.mxu0 0.0
    %719 = vmatpush1.msra.mxu0 0.0
    %720 = vmatprep.subr.mxu0 0.0
    %721 = vmatpush1.msra.mxu0 0.0
    %722 = vmatprep.subr.mxu0 0.0
    %723 = vmatpush1.msra.mxu0 0.0
    %724 = vmatprep.subr.mxu0 0.0
    %725 = vmatpush1.msra.mxu0 0.0
    %726 = vmatprep.subr.mxu0 0.0
    %727 = vmatpush1.msra.mxu0 0.0
    %728 = vmatprep.subr.mxu0 %v33
    %729 = vmatpush1.msra.mxu0 %v32
    %730 = vmatprep.subr.mxu0 %v31
    %731 = vmatpush1.msra.mxu0 %v30
    %732 = vmatprep.subr.mxu0 %v29
    %733 = vmatpush1.msra.mxu0 %v28
    %734 = vmatprep.subr.mxu0 %v27
    %735 = vmatpush1.msra.mxu0 %v26
    %736 = vmatprep.subr.mxu0 0.0
    %737 = vmatpush2.msra.mxu0 0.0
    %738 = vmatprep.subr.mxu0 0.0
    %739 = vmatpush2.msra.mxu0 0.0
    %740 = vmatprep.subr.mxu0 0.0
    %741 = vmatpush2.msra.mxu0 0.0
    %742 = vmatprep.subr.mxu0 0.0
    %743 = vmatpush2.msra.mxu0 0.0
    %744 = vmatprep.subr.mxu0 0.0
    %745 = vmatpush2.msra.mxu0 0.0
    %746 = vmatprep.subr.mxu0 0.0
    %747 = vmatpush2.msra.mxu0 0.0
    %748 = vmatprep.subr.mxu0 0.0
    %749 = vmatpush2.msra.mxu0 0.0
    %750 = vmatprep.subr.mxu0 0.0
    %751 = vmatpush2.msra.mxu0 0.0
    %752 = vmatprep.subr.mxu0 0.0
    %753 = vmatpush2.msra.mxu0 0.0
    %754 = vmatprep.subr.mxu0 0.0
    %755 = vmatpush2.msra.mxu0 0.0
    %756 = vmatprep.subr.mxu0 0.0
    %757 = vmatpush2.msra.mxu0 0.0
    %758 = vmatprep.subr.mxu0 0.0
    %759 = vmatpush2.msra.mxu0 0.0
    %760 = vmatprep.subr.mxu0 0.0
    %761 = vmatpush2.msra.mxu0 0.0
    %762 = vmatprep.subr.mxu0 0.0
    %763 = vmatpush2.msra.mxu0 0.0
    %764 = vmatprep.subr.mxu0 0.0
    %765 = vmatpush2.msra.mxu0 0.0
    %766 = vmatprep.subr.mxu0 0.0
    %767 = vmatpush2.msra.mxu0 0.0
    %768 = vmatprep.mubr.f32.mxu0 0.0
    %769 = vmatmul.mubr.f32.gmra.mxu0 %v702
    %v770 = vpop.f32.mrf.mxu0
    %v771 = vadd.f32 %v56, %v770
    %v772 = vpop.f32.mrf.mxu0
    %v773 = vadd.f32 %v60, %v772
    %774 = vdwg.mxu0
    %s775 = scalar_lea.vmem %s1, 3
    %v776 = vld [vmem:[%s775] sm:$0x1]
    %v777 = vadd.f32 %v776, %v771
    %v778 = vsel %vm140, %v777, -inf
    %779 = vmax.xlane.f32.xlu0 %v778
    %v780 = vpop.xlane.xlu0 %779
    %v781 = vsub.f32 %v777, %v780
    %v782 = vmul.f32 %v781, 1.442695
    %v783 = vpow.pop %v782
    %v784 = vsel %vm140, %v783, 0.0
    %785 = vadd.xlane.f32.xlu0 %v784
    %v786 = vpop.xlane.xlu0 %785
    %v787 = vrcp.pop %v786
    %v788 = vmul.f32 %v783, %v787
    %s789 = scalar_lea.vmem [#allocation2], 3
    %790 = vst [vmem:[%s789] sm:$0x1] %v788
    %s791 = scalar_lea.vmem %s2, 3
    %v792 = vld [vmem:[%s791] sm:$0x1]
    %793 = vmatprep.subr.mxu0 0.0
    %794 = vmatpush1.msra.mxu0 %v50
    %795 = vmatprep.subr.mxu0 0.0
    %796 = vmatpush1.msra.mxu0 %v49
    %797 = vmatprep.subr.mxu0 0.0
    %798 = vmatpush1.msra.mxu0 %v48
    %799 = vmatprep.subr.mxu0 0.0
    %800 = vmatpush1.msra.mxu0 %v47
    %801 = vmatprep.subr.mxu0 0.0
    %802 = vmatpush1.msra.mxu0 %v46
    %803 = vmatprep.subr.mxu0 0.0
    %804 = vmatpush1.msra.mxu0 %v45
    %805 = vmatprep.subr.mxu0 0.0
    %806 = vmatpush1.msra.mxu0 %v44
    %807 = vmatprep.subr.mxu0 0.0
    %808 = vmatpush1.msra.mxu0 %v43
    %809 = vmatprep.subr.mxu0 0.0
    %810 = vmatpush1.msra.mxu0 %v42
    %811 = vmatprep.subr.mxu0 0.0
    %812 = vmatpush1.msra.mxu0 %v41
    %813 = vmatprep.subr.mxu0 0.0
    %814 = vmatpush1.msra.mxu0 %v40
    %815 = vmatprep.subr.mxu0 0.0
    %816 = vmatpush1.msra.mxu0 %v39
    %817 = vmatprep.subr.mxu0 0.0
    %818 = vmatpush1.msra.mxu0 %v38
    %819 = vmatprep.subr.mxu0 0.0
    %820 = vmatpush1.msra.mxu0 %v37
    %821 = vmatprep.subr.mxu0 0.0
    %822 = vmatpush1.msra.mxu0 %v36
    %823 = vmatprep.subr.mxu0 0.0
    %824 = vmatpush1.msra.mxu0 %v35
    %825 = vmatprep.subr.mxu0 0.0
    %826 = vmatpush2.msra.mxu0 0.0
    %827 = vmatprep.subr.mxu0 0.0
    %828 = vmatpush2.msra.mxu0 0.0
    %829 = vmatprep.subr.mxu0 0.0
    %830 = vmatpush2.msra.mxu0 0.0
    %831 = vmatprep.subr.mxu0 0.0
    %832 = vmatpush2.msra.mxu0 0.0
    %833 = vmatprep.subr.mxu0 0.0
    %834 = vmatpush2.msra.mxu0 0.0
    %835 = vmatprep.subr.mxu0 0.0
    %836 = vmatpush2.msra.mxu0 0.0
    %837 = vmatprep.subr.mxu0 0.0
    %838 = vmatpush2.msra.mxu0 0.0
    %839 = vmatprep.subr.mxu0 0.0
    %840 = vmatpush2.msra.mxu0 0.0
    %841 = vmatprep.subr.mxu0 0.0
    %842 = vmatpush2.msra.mxu0 0.0
    %843 = vmatprep.subr.mxu0 0.0
    %844 = vmatpush2.msra.mxu0 0.0
    %845 = vmatprep.subr.mxu0 0.0
    %846 = vmatpush2.msra.mxu0 0.0
    %847 = vmatprep.subr.mxu0 0.0
    %848 = vmatpush2.msra.mxu0 0.0
    %849 = vmatprep.subr.mxu0 0.0
    %850 = vmatpush2.msra.mxu0 0.0
    %851 = vmatprep.subr.mxu0 0.0
    %852 = vmatpush2.msra.mxu0 0.0
    %853 = vmatprep.subr.mxu0 0.0
    %854 = vmatpush2.msra.mxu0 0.0
    %855 = vmatprep.subr.mxu0 0.0
    %856 = vmatpush2.msra.mxu0 0.0
    %857 = vmatprep.mubr.f32.mxu0 0.0
    %858 = vmatmul.mubr.f32.gmra.mxu0 %v788
    %v859 = vpop.f32.mrf.mxu0
    %v860 = vadd.f32 0.0, %v859
    %v861 = vpop.f32.mrf.mxu0
    %862 = vdwg.mxu0
    %v863 = vadd.f32 %v792, %v860
    %v864 = vadd.f32 %v863, %v773
    %v865 = vxor.u32 %v864, 2147483648
    %v866 = vmul.f32 %v865, 1.442695
    %v867 = vpow.pop %v866
    %v868 = vadd.f32 %v867, 1.0
    %v869 = vrcp.pop %v868
    %v870 = vmul.f32 1.0, %v869
    %v873 = vunpack.c.l.s4 1966171168
    %v874 = vunpack.c.0.s8 %v873
    %v875 = vlaneseq
    %v876 = vshrl.u32 %v875, 7
    %v877 = vsub.s32 %v874, %v876
    %v878 = vrot.slane %v773, %v877
    %v880 = vunpack.c.l.s4 1966171168
    %v881 = vunpack.c.0.s8 %v880
    %v882 = vlaneseq
    %v883 = vshrl.u32 %v882, 7
    %v884 = vsub.s32 %v881, %v883
    %v885 = vrot.slane %v878, %v884
    %886 = vrot.lane.b32.xlu0 %v885, 64
    %v887 = vpop.permute.xlu0 %886
    %v889 = vmul.f32 %v870, %v887
    %891 = vrot.lane.b32.xlu0 %v889, 64
    %v892 = vpop.permute.xlu0 %891
    %v894 = vadd.f32 %v863, %v892
    %v895 = vtanh.pop %v894
    %v896 = vsub.f32 1.0, %v870
    %898 = vrot.lane.b32.xlu0 %v895, 96
    %v899 = vpop.permute.xlu0 %898
    %v901 = vmul.f32 %v896, %v899
    %v902 = vmul.f32 %v870, %v691
    %v903 = vadd.f32 %v901, %v902
    %v905 = vlaneseq
    %v906 = vshrl.u32 %v905, 7
    %v907 = vsub.s32 0, %v906
    %v908 = vrot.slane %v903, %v907
    %909 = vrot.lane.b32.xlu0 %v908, 96
    %v910 = vpop.permute.xlu0 %909
    %s912 = scalar_lea.vmem %s6, 3
    %913 = vst.msk [vmem:[%s912] sm:$0x1] %vm276, %v910
    %v914 = vsel %vm63, %v910, 0
    %916 = vmatprep.subr.mxu0 0.0
    %917 = vmatpush1.msra.mxu0 0.0
    %918 = vmatprep.subr.mxu0 0.0
    %919 = vmatpush1.msra.mxu0 0.0
    %920 = vmatprep.subr.mxu0 0.0
    %921 = vmatpush1.msra.mxu0 0.0
    %922 = vmatprep.subr.mxu0 0.0
    %923 = vmatpush1.msra.mxu0 0.0
    %924 = vmatprep.subr.mxu0 0.0
    %925 = vmatpush1.msra.mxu0 0.0
    %926 = vmatprep.subr.mxu0 0.0
    %927 = vmatpush1.msra.mxu0 0.0
    %928 = vmatprep.subr.mxu0 0.0
    %929 = vmatpush1.msra.mxu0 0.0
    %930 = vmatprep.subr.mxu0 0.0
    %931 = vmatpush1.msra.mxu0 0.0
    %932 = vmatprep.subr.mxu0 0.0
    %933 = vmatpush1.msra.mxu0 0.0
    %934 = vmatprep.subr.mxu0 0.0
    %935 = vmatpush1.msra.mxu0 0.0
    %936 = vmatprep.subr.mxu0 0.0
    %937 = vmatpush1.msra.mxu0 0.0
    %938 = vmatprep.subr.mxu0 0.0
    %939 = vmatpush1.msra.mxu0 0.0
    %940 = vmatprep.subr.mxu0 %v33
    %941 = vmatpush1.msra.mxu0 %v32
    %942 = vmatprep.subr.mxu0 %v31
    %943 = vmatpush1.msra.mxu0 %v30
    %944 = vmatprep.subr.mxu0 %v29
    %945 = vmatpush1.msra.mxu0 %v28
    %946 = vmatprep.subr.mxu0 %v27
    %947 = vmatpush1.msra.mxu0 %v26
    %948 = vmatprep.subr.mxu0 0.0
    %949 = vmatpush2.msra.mxu0 0.0
    %950 = vmatprep.subr.mxu0 0.0
    %951 = vmatpush2.msra.mxu0 0.0
    %952 = vmatprep.subr.mxu0 0.0
    %953 = vmatpush2.msra.mxu0 0.0
    %954 = vmatprep.subr.mxu0 0.0
    %955 = vmatpush2.msra.mxu0 0.0
    %956 = vmatprep.subr.mxu0 0.0
    %957 = vmatpush2.msra.mxu0 0.0
    %958 = vmatprep.subr.mxu0 0.0
    %959 = vmatpush2.msra.mxu0 0.0
    %960 = vmatprep.subr.mxu0 0.0
    %961 = vmatpush2.msra.mxu0 0.0
    %962 = vmatprep.subr.mxu0 0.0
    %963 = vmatpush2.msra.mxu0 0.0
    %964 = vmatprep.subr.mxu0 0.0
    %965 = vmatpush2.msra.mxu0 0.0
    %966 = vmatprep.subr.mxu0 0.0
    %967 = vmatpush2.msra.mxu0 0.0
    %968 = vmatprep.subr.mxu0 0.0
    %969 = vmatpush2.msra.mxu0 0.0
    %970 = vmatprep.subr.mxu0 0.0
    %971 = vmatpush2.msra.mxu0 0.0
    %972 = vmatprep.subr.mxu0 0.0
    %973 = vmatpush2.msra.mxu0 0.0
    %974 = vmatprep.subr.mxu0 0.0
    %975 = vmatpush2.msra.mxu0 0.0
    %976 = vmatprep.subr.mxu0 0.0
    %977 = vmatpush2.msra.mxu0 0.0
    %978 = vmatprep.subr.mxu0 0.0
    %979 = vmatpush2.msra.mxu0 0.0
    %980 = vmatprep.mubr.f32.mxu0 0.0
    %981 = vmatmul.mubr.f32.gmra.mxu0 %v914
    %v982 = vpop.f32.mrf.mxu0
    %v983 = vadd.f32 %v56, %v982
    %v984 = vpop.f32.mrf.mxu0
    %v985 = vadd.f32 %v60, %v984
    %986 = vdwg.mxu0
    %s987 = scalar_lea.vmem %s1, 4
    %v988 = vld [vmem:[%s987] sm:$0x1]
    %v989 = vadd.f32 %v988, %v983
    %v990 = vsel %vm140, %v989, -inf
    %991 = vmax.xlane.f32.xlu0 %v990
    %v992 = vpop.xlane.xlu0 %991
    %v993 = vsub.f32 %v989, %v992
    %v994 = vmul.f32 %v993, 1.442695
    %v995 = vpow.pop %v994
    %v996 = vsel %vm140, %v995, 0.0
    %997 = vadd.xlane.f32.xlu0 %v996
    %v998 = vpop.xlane.xlu0 %997
    %v999 = vrcp.pop %v998
    %v1000 = vmul.f32 %v995, %v999
    %s1001 = scalar_lea.vmem [#allocation2], 4
    %1002 = vst [vmem:[%s1001] sm:$0x1] %v1000
    %s1003 = scalar_lea.vmem %s2, 4
    %v1004 = vld [vmem:[%s1003] sm:$0x1]
    %1005 = vmatprep.subr.mxu0 0.0
    %1006 = vmatpush1.msra.mxu0 %v50
    %1007 = vmatprep.subr.mxu0 0.0
    %1008 = vmatpush1.msra.mxu0 %v49
    %1009 = vmatprep.subr.mxu0 0.0
    %1010 = vmatpush1.msra.mxu0 %v48
    %1011 = vmatprep.subr.mxu0 0.0
    %1012 = vmatpush1.msra.mxu0 %v47
    %1013 = vmatprep.subr.mxu0 0.0
    %1014 = vmatpush1.msra.mxu0 %v46
    %1015 = vmatprep.subr.mxu0 0.0
    %1016 = vmatpush1.msra.mxu0 %v45
    %1017 = vmatprep.subr.mxu0 0.0
    %1018 = vmatpush1.msra.mxu0 %v44
    %1019 = vmatprep.subr.mxu0 0.0
    %1020 = vmatpush1.msra.mxu0 %v43
    %1021 = vmatprep.subr.mxu0 0.0
    %1022 = vmatpush1.msra.mxu0 %v42
    %1023 = vmatprep.subr.mxu0 0.0
    %1024 = vmatpush1.msra.mxu0 %v41
    %1025 = vmatprep.subr.mxu0 0.0
    %1026 = vmatpush1.msra.mxu0 %v40
    %1027 = vmatprep.subr.mxu0 0.0
    %1028 = vmatpush1.msra.mxu0 %v39
    %1029 = vmatprep.subr.mxu0 0.0
    %1030 = vmatpush1.msra.mxu0 %v38
    %1031 = vmatprep.subr.mxu0 0.0
    %1032 = vmatpush1.msra.mxu0 %v37
    %1033 = vmatprep.subr.mxu0 0.0
    %1034 = vmatpush1.msra.mxu0 %v36
    %1035 = vmatprep.subr.mxu0 0.0
    %1036 = vmatpush1.msra.mxu0 %v35
    %1037 = vmatprep.subr.mxu0 0.0
    %1038 = vmatpush2.msra.mxu0 0.0
    %1039 = vmatprep.subr.mxu0 0.0
    %1040 = vmatpush2.msra.mxu0 0.0
    %1041 = vmatprep.subr.mxu0 0.0
    %1042 = vmatpush2.msra.mxu0 0.0
    %1043 = vmatprep.subr.mxu0 0.0
    %1044 = vmatpush2.msra.mxu0 0.0
    %1045 = vmatprep.subr.mxu0 0.0
    %1046 = vmatpush2.msra.mxu0 0.0
    %1047 = vmatprep.subr.mxu0 0.0
    %1048 = vmatpush2.msra.mxu0 0.0
    %1049 = vmatprep.subr.mxu0 0.0
    %1050 = vmatpush2.msra.mxu0 0.0
    %1051 = vmatprep.subr.mxu0 0.0
    %1052 = vmatpush2.msra.mxu0 0.0
    %1053 = vmatprep.subr.mxu0 0.0
    %1054 = vmatpush2.msra.mxu0 0.0
    %1055 = vmatprep.subr.mxu0 0.0
    %1056 = vmatpush2.msra.mxu0 0.0
    %1057 = vmatprep.subr.mxu0 0.0
    %1058 = vmatpush2.msra.mxu0 0.0
    %1059 = vmatprep.subr.mxu0 0.0
    %1060 = vmatpush2.msra.mxu0 0.0
    %1061 = vmatprep.subr.mxu0 0.0
    %1062 = vmatpush2.msra.mxu0 0.0
    %1063 = vmatprep.subr.mxu0 0.0
    %1064 = vmatpush2.msra.mxu0 0.0
    %1065 = vmatprep.subr.mxu0 0.0
    %1066 = vmatpush2.msra.mxu0 0.0
    %1067 = vmatprep.subr.mxu0 0.0
    %1068 = vmatpush2.msra.mxu0 0.0
    %1069 = vmatprep.mubr.f32.mxu0 0.0
    %1070 = vmatmul.mubr.f32.gmra.mxu0 %v1000
    %v1071 = vpop.f32.mrf.mxu0
    %v1072 = vadd.f32 0.0, %v1071
    %v1073 = vpop.f32.mrf.mxu0
    %1074 = vdwg.mxu0
    %v1075 = vadd.f32 %v1004, %v1072
    %v1076 = vadd.f32 %v1075, %v985
    %v1077 = vxor.u32 %v1076, 2147483648
    %v1078 = vmul.f32 %v1077, 1.442695
    %v1079 = vpow.pop %v1078
    %v1080 = vadd.f32 %v1079, 1.0
    %v1081 = vrcp.pop %v1080
    %v1082 = vmul.f32 1.0, %v1081
    %v1085 = vunpack.c.l.s4 1966171168
    %v1086 = vunpack.c.0.s8 %v1085
    %v1087 = vlaneseq
    %v1088 = vshrl.u32 %v1087, 7
    %v1089 = vsub.s32 %v1086, %v1088
    %v1090 = vrot.slane %v985, %v1089
    %v1092 = vunpack.c.l.s4 1966171168
    %v1093 = vunpack.c.0.s8 %v1092
    %v1094 = vlaneseq
    %v1095 = vshrl.u32 %v1094, 7
    %v1096 = vsub.s32 %v1093, %v1095
    %v1097 = vrot.slane %v1090, %v1096
    %1098 = vrot.lane.b32.xlu0 %v1097, 64
    %v1099 = vpop.permute.xlu0 %1098
    %v1101 = vmul.f32 %v1082, %v1099
    %1103 = vrot.lane.b32.xlu0 %v1101, 64
    %v1104 = vpop.permute.xlu0 %1103
    %v1106 = vadd.f32 %v1075, %v1104
    %v1107 = vtanh.pop %v1106
    %v1108 = vsub.f32 1.0, %v1082
    %1110 = vrot.lane.b32.xlu0 %v1107, 96
    %v1111 = vpop.permute.xlu0 %1110
    %v1113 = vmul.f32 %v1108, %v1111
    %v1114 = vmul.f32 %v1082, %v903
    %v1115 = vadd.f32 %v1113, %v1114
    %v1117 = vlaneseq
    %v1118 = vshrl.u32 %v1117, 7
    %v1119 = vsub.s32 0, %v1118
    %v1120 = vrot.slane %v1115, %v1119
    %1121 = vrot.lane.b32.xlu0 %v1120, 96
    %v1122 = vpop.permute.xlu0 %1121
    %s1124 = scalar_lea.vmem %s6, 4
    %1125 = vst.msk [vmem:[%s1124] sm:$0x1] %vm276, %v1122
    %v1126 = vsel %vm63, %v1122, 0
    %1128 = vmatprep.subr.mxu0 0.0
    %1129 = vmatpush1.msra.mxu0 0.0
    %1130 = vmatprep.subr.mxu0 0.0
    %1131 = vmatpush1.msra.mxu0 0.0
    %1132 = vmatprep.subr.mxu0 0.0
    %1133 = vmatpush1.msra.mxu0 0.0
    %1134 = vmatprep.subr.mxu0 0.0
    %1135 = vmatpush1.msra.mxu0 0.0
    %1136 = vmatprep.subr.mxu0 0.0
    %1137 = vmatpush1.msra.mxu0 0.0
    %1138 = vmatprep.subr.mxu0 0.0
    %1139 = vmatpush1.msra.mxu0 0.0
    %1140 = vmatprep.subr.mxu0 0.0
    %1141 = vmatpush1.msra.mxu0 0.0
    %1142 = vmatprep.subr.mxu0 0.0
    %1143 = vmatpush1.msra.mxu0 0.0
    %1144 = vmatprep.subr.mxu0 0.0
    %1145 = vmatpush1.msra.mxu0 0.0
    %1146 = vmatprep.subr.mxu0 0.0
    %1147 = vmatpush1.msra.mxu0 0.0
    %1148 = vmatprep.subr.mxu0 0.0
    %1149 = vmatpush1.msra.mxu0 0.0
    %1150 = vmatprep.subr.mxu0 0.0
    %1151 = vmatpush1.msra.mxu0 0.0
    %1152 = vmatprep.subr.mxu0 %v33
    %1153 = vmatpush1.msra.mxu0 %v32
    %1154 = vmatprep.subr.mxu0 %v31
    %1155 = vmatpush1.msra.mxu0 %v30
    %1156 = vmatprep.subr.mxu0 %v29
    %1157 = vmatpush1.msra.mxu0 %v28
    %1158 = vmatprep.subr.mxu0 %v27
    %1159 = vmatpush1.msra.mxu0 %v26
    %1160 = vmatprep.subr.mxu0 0.0
    %1161 = vmatpush2.msra.mxu0 0.0
    %1162 = vmatprep.subr.mxu0 0.0
    %1163 = vmatpush2.msra.mxu0 0.0
    %1164 = vmatprep.subr.mxu0 0.0
    %1165 = vmatpush2.msra.mxu0 0.0
    %1166 = vmatprep.subr.mxu0 0.0
    %1167 = vmatpush2.msra.mxu0 0.0
    %1168 = vmatprep.subr.mxu0 0.0
    %1169 = vmatpush2.msra.mxu0 0.0
    %1170 = vmatprep.subr.mxu0 0.0
    %1171 = vmatpush2.msra.mxu0 0.0
    %1172 = vmatprep.subr.mxu0 0.0
    %1173 = vmatpush2.msra.mxu0 0.0
    %1174 = vmatprep.subr.mxu0 0.0
    %1175 = vmatpush2.msra.mxu0 0.0
    %1176 = vmatprep.subr.mxu0 0.0
    %1177 = vmatpush2.msra.mxu0 0.0
    %1178 = vmatprep.subr.mxu0 0.0
    %1179 = vmatpush2.msra.mxu0 0.0
    %1180 = vmatprep.subr.mxu0 0.0
    %1181 = vmatpush2.msra.mxu0 0.0
    %1182 = vmatprep.subr.mxu0 0.0
    %1183 = vmatpush2.msra.mxu0 0.0
    %1184 = vmatprep.subr.mxu0 0.0
    %1185 = vmatpush2.msra.mxu0 0.0
    %1186 = vmatprep.subr.mxu0 0.0
    %1187 = vmatpush2.msra.mxu0 0.0
    %1188 = vmatprep.subr.mxu0 0.0
    %1189 = vmatpush2.msra.mxu0 0.0
    %1190 = vmatprep.subr.mxu0 0.0
    %1191 = vmatpush2.msra.mxu0 0.0
    %1192 = vmatprep.mubr.f32.mxu0 0.0
    %1193 = vmatmul.mubr.f32.gmra.mxu0 %v1126
    %v1194 = vpop.f32.mrf.mxu0
    %v1195 = vadd.f32 %v56, %v1194
    %v1196 = vpop.f32.mrf.mxu0
    %v1197 = vadd.f32 %v60, %v1196
    %1198 = vdwg.mxu0
    %s1199 = scalar_lea.vmem %s1, 5
    %v1200 = vld [vmem:[%s1199] sm:$0x1]
    %v1201 = vadd.f32 %v1200, %v1195
    %v1202 = vsel %vm140, %v1201, -inf
    %1203 = vmax.xlane.f32.xlu0 %v1202
    %v1204 = vpop.xlane.xlu0 %1203
    %v1205 = vsub.f32 %v1201, %v1204
    %v1206 = vmul.f32 %v1205, 1.442695
    %v1207 = vpow.pop %v1206
    %v1208 = vsel %vm140, %v1207, 0.0
    %1209 = vadd.xlane.f32.xlu0 %v1208
    %v1210 = vpop.xlane.xlu0 %1209
    %v1211 = vrcp.pop %v1210
    %v1212 = vmul.f32 %v1207, %v1211
    %s1213 = scalar_lea.vmem [#allocation2], 5
    %1214 = vst [vmem:[%s1213] sm:$0x1] %v1212
    %s1215 = scalar_lea.vmem %s2, 5
    %v1216 = vld [vmem:[%s1215] sm:$0x1]
    %1217 = vmatprep.subr.mxu0 0.0
    %1218 = vmatpush1.msra.mxu0 %v50
    %1219 = vmatprep.subr.mxu0 0.0
    %1220 = vmatpush1.msra.mxu0 %v49
    %1221 = vmatprep.subr.mxu0 0.0
    %1222 = vmatpush1.msra.mxu0 %v48
    %1223 = vmatprep.subr.mxu0 0.0
    %1224 = vmatpush1.msra.mxu0 %v47
    %1225 = vmatprep.subr.mxu0 0.0
    %1226 = vmatpush1.msra.mxu0 %v46
    %1227 = vmatprep.subr.mxu0 0.0
    %1228 = vmatpush1.msra.mxu0 %v45
    %1229 = vmatprep.subr.mxu0 0.0
    %1230 = vmatpush1.msra.mxu0 %v44
    %1231 = vmatprep.subr.mxu0 0.0
    %1232 = vmatpush1.msra.mxu0 %v43
    %1233 = vmatprep.subr.mxu0 0.0
    %1234 = vmatpush1.msra.mxu0 %v42
    %1235 = vmatprep.subr.mxu0 0.0
    %1236 = vmatpush1.msra.mxu0 %v41
    %1237 = vmatprep.subr.mxu0 0.0
    %1238 = vmatpush1.msra.mxu0 %v40
    %1239 = vmatprep.subr.mxu0 0.0
    %1240 = vmatpush1.msra.mxu0 %v39
    %1241 = vmatprep.subr.mxu0 0.0
    %1242 = vmatpush1.msra.mxu0 %v38
    %1243 = vmatprep.subr.mxu0 0.0
    %1244 = vmatpush1.msra.mxu0 %v37
    %1245 = vmatprep.subr.mxu0 0.0
    %1246 = vmatpush1.msra.mxu0 %v36
    %1247 = vmatprep.subr.mxu0 0.0
    %1248 = vmatpush1.msra.mxu0 %v35
    %1249 = vmatprep.subr.mxu0 0.0
    %1250 = vmatpush2.msra.mxu0 0.0
    %1251 = vmatprep.subr.mxu0 0.0
    %1252 = vmatpush2.msra.mxu0 0.0
    %1253 = vmatprep.subr.mxu0 0.0
    %1254 = vmatpush2.msra.mxu0 0.0
    %1255 = vmatprep.subr.mxu0 0.0
    %1256 = vmatpush2.msra.mxu0 0.0
    %1257 = vmatprep.subr.mxu0 0.0
    %1258 = vmatpush2.msra.mxu0 0.0
    %1259 = vmatprep.subr.mxu0 0.0
    %1260 = vmatpush2.msra.mxu0 0.0
    %1261 = vmatprep.subr.mxu0 0.0
    %1262 = vmatpush2.msra.mxu0 0.0
    %1263 = vmatprep.subr.mxu0 0.0
    %1264 = vmatpush2.msra.mxu0 0.0
    %1265 = vmatprep.subr.mxu0 0.0
    %1266 = vmatpush2.msra.mxu0 0.0
    %1267 = vmatprep.subr.mxu0 0.0
    %1268 = vmatpush2.msra.mxu0 0.0
    %1269 = vmatprep.subr.mxu0 0.0
    %1270 = vmatpush2.msra.mxu0 0.0
    %1271 = vmatprep.subr.mxu0 0.0
    %1272 = vmatpush2.msra.mxu0 0.0
    %1273 = vmatprep.subr.mxu0 0.0
    %1274 = vmatpush2.msra.mxu0 0.0
    %1275 = vmatprep.subr.mxu0 0.0
    %1276 = vmatpush2.msra.mxu0 0.0
    %1277 = vmatprep.subr.mxu0 0.0
    %1278 = vmatpush2.msra.mxu0 0.0
    %1279 = vmatprep.subr.mxu0 0.0
    %1280 = vmatpush2.msra.mxu0 0.0
    %1281 = vmatprep.mubr.f32.mxu0 0.0
    %1282 = vmatmul.mubr.f32.gmra.mxu0 %v1212
    %v1283 = vpop.f32.mrf.mxu0
    %v1284 = vadd.f32 0.0, %v1283
    %v1285 = vpop.f32.mrf.mxu0
    %1286 = vdwg.mxu0
    %v1287 = vadd.f32 %v1216, %v1284
    %v1288 = vadd.f32 %v1287, %v1197
    %v1289 = vxor.u32 %v1288, 2147483648
    %v1290 = vmul.f32 %v1289, 1.442695
    %v1291 = vpow.pop %v1290
    %v1292 = vadd.f32 %v1291, 1.0
    %v1293 = vrcp.pop %v1292
    %v1294 = vmul.f32 1.0, %v1293
    %v1297 = vunpack.c.l.s4 1966171168
    %v1298 = vunpack.c.0.s8 %v1297
    %v1299 = vlaneseq
    %v1300 = vshrl.u32 %v1299, 7
    %v1301 = vsub.s32 %v1298, %v1300
    %v1302 = vrot.slane %v1197, %v1301
    %v1304 = vunpack.c.l.s4 1966171168
    %v1305 = vunpack.c.0.s8 %v1304
    %v1306 = vlaneseq
    %v1307 = vshrl.u32 %v1306, 7
    %v1308 = vsub.s32 %v1305, %v1307
    %v1309 = vrot.slane %v1302, %v1308
    %1310 = vrot.lane.b32.xlu0 %v1309, 64
    %v1311 = vpop.permute.xlu0 %1310
    %v1313 = vmul.f32 %v1294, %v1311
    %1315 = vrot.lane.b32.xlu0 %v1313, 64
    %v1316 = vpop.permute.xlu0 %1315
    %v1318 = vadd.f32 %v1287, %v1316
    %v1319 = vtanh.pop %v1318
    %v1320 = vsub.f32 1.0, %v1294
    %1322 = vrot.lane.b32.xlu0 %v1319, 96
    %v1323 = vpop.permute.xlu0 %1322
    %v1325 = vmul.f32 %v1320, %v1323
    %v1326 = vmul.f32 %v1294, %v1115
    %v1327 = vadd.f32 %v1325, %v1326
    %v1329 = vlaneseq
    %v1330 = vshrl.u32 %v1329, 7
    %v1331 = vsub.s32 0, %v1330
    %v1332 = vrot.slane %v1327, %v1331
    %1333 = vrot.lane.b32.xlu0 %v1332, 96
    %v1334 = vpop.permute.xlu0 %1333
    %s1336 = scalar_lea.vmem %s6, 5
    %1337 = vst.msk [vmem:[%s1336] sm:$0x1] %vm276, %v1334
    %v1338 = vsel %vm63, %v1334, 0
    %1340 = vmatprep.subr.mxu0 0.0
    %1341 = vmatpush1.msra.mxu0 0.0
    %1342 = vmatprep.subr.mxu0 0.0
    %1343 = vmatpush1.msra.mxu0 0.0
    %1344 = vmatprep.subr.mxu0 0.0
    %1345 = vmatpush1.msra.mxu0 0.0
    %1346 = vmatprep.subr.mxu0 0.0
    %1347 = vmatpush1.msra.mxu0 0.0
    %1348 = vmatprep.subr.mxu0 0.0
    %1349 = vmatpush1.msra.mxu0 0.0
    %1350 = vmatprep.subr.mxu0 0.0
    %1351 = vmatpush1.msra.mxu0 0.0
    %1352 = vmatprep.subr.mxu0 0.0
    %1353 = vmatpush1.msra.mxu0 0.0
    %1354 = vmatprep.subr.mxu0 0.0
    %1355 = vmatpush1.msra.mxu0 0.0
    %1356 = vmatprep.subr.mxu0 0.0
    %1357 = vmatpush1.msra.mxu0 0.0
    %1358 = vmatprep.subr.mxu0 0.0
    %1359 = vmatpush1.msra.mxu0 0.0
    %1360 = vmatprep.subr.mxu0 0.0
    %1361 = vmatpush1.msra.mxu0 0.0
    %1362 = vmatprep.subr.mxu0 0.0
    %1363 = vmatpush1.msra.mxu0 0.0
    %1364 = vmatprep.subr.mxu0 %v33
    %1365 = vmatpush1.msra.mxu0 %v32
    %1366 = vmatprep.subr.mxu0 %v31
    %1367 = vmatpush1.msra.mxu0 %v30
    %1368 = vmatprep.subr.mxu0 %v29
    %1369 = vmatpush1.msra.mxu0 %v28
    %1370 = vmatprep.subr.mxu0 %v27
    %1371 = vmatpush1.msra.mxu0 %v26
    %1372 = vmatprep.subr.mxu0 0.0
    %1373 = vmatpush2.msra.mxu0 0.0
    %1374 = vmatprep.subr.mxu0 0.0
    %1375 = vmatpush2.msra.mxu0 0.0
    %1376 = vmatprep.subr.mxu0 0.0
    %1377 = vmatpush2.msra.mxu0 0.0
    %1378 = vmatprep.subr.mxu0 0.0
    %1379 = vmatpush2.msra.mxu0 0.0
    %1380 = vmatprep.subr.mxu0 0.0
    %1381 = vmatpush2.msra.mxu0 0.0
    %1382 = vmatprep.subr.mxu0 0.0
    %1383 = vmatpush2.msra.mxu0 0.0
    %1384 = vmatprep.subr.mxu0 0.0
    %1385 = vmatpush2.msra.mxu0 0.0
    %1386 = vmatprep.subr.mxu0 0.0
    %1387 = vmatpush2.msra.mxu0 0.0
    %1388 = vmatprep.subr.mxu0 0.0
    %1389 = vmatpush2.msra.mxu0 0.0
    %1390 = vmatprep.subr.mxu0 0.0
    %1391 = vmatpush2.msra.mxu0 0.0
    %1392 = vmatprep.subr.mxu0 0.0
    %1393 = vmatpush2.msra.mxu0 0.0
    %1394 = vmatprep.subr.mxu0 0.0
    %1395 = vmatpush2.msra.mxu0 0.0
    %1396 = vmatprep.subr.mxu0 0.0
    %1397 = vmatpush2.msra.mxu0 0.0
    %1398 = vmatprep.subr.mxu0 0.0
    %1399 = vmatpush2.msra.mxu0 0.0
    %1400 = vmatprep.subr.mxu0 0.0
    %1401 = vmatpush2.msra.mxu0 0.0
    %1402 = vmatprep.subr.mxu0 0.0
    %1403 = vmatpush2.msra.mxu0 0.0
    %1404 = vmatprep.mubr.f32.mxu0 0.0
    %1405 = vmatmul.mubr.f32.gmra.mxu0 %v1338
    %v1406 = vpop.f32.mrf.mxu0
    %v1407 = vadd.f32 %v56, %v1406
    %v1408 = vpop.f32.mrf.mxu0
    %v1409 = vadd.f32 %v60, %v1408
    %1410 = vdwg.mxu0
    %s1411 = scalar_lea.vmem %s1, 6
    %v1412 = vld [vmem:[%s1411] sm:$0x1]
    %v1413 = vadd.f32 %v1412, %v1407
    %v1414 = vsel %vm140, %v1413, -inf
    %1415 = vmax.xlane.f32.xlu0 %v1414
    %v1416 = vpop.xlane.xlu0 %1415
    %v1417 = vsub.f32 %v1413, %v1416
    %v1418 = vmul.f32 %v1417, 1.442695
    %v1419 = vpow.pop %v1418
    %v1420 = vsel %vm140, %v1419, 0.0
    %1421 = vadd.xlane.f32.xlu0 %v1420
    %v1422 = vpop.xlane.xlu0 %1421
    %v1423 = vrcp.pop %v1422
    %v1424 = vmul.f32 %v1419, %v1423
    %s1425 = scalar_lea.vmem [#allocation2], 6
    %1426 = vst [vmem:[%s1425] sm:$0x1] %v1424
    %s1427 = scalar_lea.vmem %s2, 6
    %v1428 = vld [vmem:[%s1427] sm:$0x1]
    %1429 = vmatprep.subr.mxu0 0.0
    %1430 = vmatpush1.msra.mxu0 %v50
    %1431 = vmatprep.subr.mxu0 0.0
    %1432 = vmatpush1.msra.mxu0 %v49
    %1433 = vmatprep.subr.mxu0 0.0
    %1434 = vmatpush1.msra.mxu0 %v48
    %1435 = vmatprep.subr.mxu0 0.0
    %1436 = vmatpush1.msra.mxu0 %v47
    %1437 = vmatprep.subr.mxu0 0.0
    %1438 = vmatpush1.msra.mxu0 %v46
    %1439 = vmatprep.subr.mxu0 0.0
    %1440 = vmatpush1.msra.mxu0 %v45
    %1441 = vmatprep.subr.mxu0 0.0
    %1442 = vmatpush1.msra.mxu0 %v44
    %1443 = vmatprep.subr.mxu0 0.0
    %1444 = vmatpush1.msra.mxu0 %v43
    %1445 = vmatprep.subr.mxu0 0.0
    %1446 = vmatpush1.msra.mxu0 %v42
    %1447 = vmatprep.subr.mxu0 0.0
    %1448 = vmatpush1.msra.mxu0 %v41
    %1449 = vmatprep.subr.mxu0 0.0
    %1450 = vmatpush1.msra.mxu0 %v40
    %1451 = vmatprep.subr.mxu0 0.0
    %1452 = vmatpush1.msra.mxu0 %v39
    %1453 = vmatprep.subr.mxu0 0.0
    %1454 = vmatpush1.msra.mxu0 %v38
    %1455 = vmatprep.subr.mxu0 0.0
    %1456 = vmatpush1.msra.mxu0 %v37
    %1457 = vmatprep.subr.mxu0 0.0
    %1458 = vmatpush1.msra.mxu0 %v36
    %1459 = vmatprep.subr.mxu0 0.0
    %1460 = vmatpush1.msra.mxu0 %v35
    %1461 = vmatprep.subr.mxu0 0.0
    %1462 = vmatpush2.msra.mxu0 0.0
    %1463 = vmatprep.subr.mxu0 0.0
    %1464 = vmatpush2.msra.mxu0 0.0
    %1465 = vmatprep.subr.mxu0 0.0
    %1466 = vmatpush2.msra.mxu0 0.0
    %1467 = vmatprep.subr.mxu0 0.0
    %1468 = vmatpush2.msra.mxu0 0.0
    %1469 = vmatprep.subr.mxu0 0.0
    %1470 = vmatpush2.msra.mxu0 0.0
    %1471 = vmatprep.subr.mxu0 0.0
    %1472 = vmatpush2.msra.mxu0 0.0
    %1473 = vmatprep.subr.mxu0 0.0
    %1474 = vmatpush2.msra.mxu0 0.0
    %1475 = vmatprep.subr.mxu0 0.0
    %1476 = vmatpush2.msra.mxu0 0.0
    %1477 = vmatprep.subr.mxu0 0.0
    %1478 = vmatpush2.msra.mxu0 0.0
    %1479 = vmatprep.subr.mxu0 0.0
    %1480 = vmatpush2.msra.mxu0 0.0
    %1481 = vmatprep.subr.mxu0 0.0
    %1482 = vmatpush2.msra.mxu0 0.0
    %1483 = vmatprep.subr.mxu0 0.0
    %1484 = vmatpush2.msra.mxu0 0.0
    %1485 = vmatprep.subr.mxu0 0.0
    %1486 = vmatpush2.msra.mxu0 0.0
    %1487 = vmatprep.subr.mxu0 0.0
    %1488 = vmatpush2.msra.mxu0 0.0
    %1489 = vmatprep.subr.mxu0 0.0
    %1490 = vmatpush2.msra.mxu0 0.0
    %1491 = vmatprep.subr.mxu0 0.0
    %1492 = vmatpush2.msra.mxu0 0.0
    %1493 = vmatprep.mubr.f32.mxu0 0.0
    %1494 = vmatmul.mubr.f32.gmra.mxu0 %v1424
    %v1495 = vpop.f32.mrf.mxu0
    %v1496 = vadd.f32 0.0, %v1495
    %v1497 = vpop.f32.mrf.mxu0
    %1498 = vdwg.mxu0
    %v1499 = vadd.f32 %v1428, %v1496
    %v1500 = vadd.f32 %v1499, %v1409
    %v1501 = vxor.u32 %v1500, 2147483648
    %v1502 = vmul.f32 %v1501, 1.442695
    %v1503 = vpow.pop %v1502
    %v1504 = vadd.f32 %v1503, 1.0
    %v1505 = vrcp.pop %v1504
    %v1506 = vmul.f32 1.0, %v1505
    %v1509 = vunpack.c.l.s4 1966171168
    %v1510 = vunpack.c.0.s8 %v1509
    %v1511 = vlaneseq
    %v1512 = vshrl.u32 %v1511, 7
    %v1513 = vsub.s32 %v1510, %v1512
    %v1514 = vrot.slane %v1409, %v1513
    %v1516 = vunpack.c.l.s4 1966171168
    %v1517 = vunpack.c.0.s8 %v1516
    %v1518 = vlaneseq
    %v1519 = vshrl.u32 %v1518, 7
    %v1520 = vsub.s32 %v1517, %v1519
    %v1521 = vrot.slane %v1514, %v1520
    %1522 = vrot.lane.b32.xlu0 %v1521, 64
    %v1523 = vpop.permute.xlu0 %1522
    %v1525 = vmul.f32 %v1506, %v1523
    %1527 = vrot.lane.b32.xlu0 %v1525, 64
    %v1528 = vpop.permute.xlu0 %1527
    %v1530 = vadd.f32 %v1499, %v1528
    %v1531 = vtanh.pop %v1530
    %v1532 = vsub.f32 1.0, %v1506
    %1534 = vrot.lane.b32.xlu0 %v1531, 96
    %v1535 = vpop.permute.xlu0 %1534
    %v1537 = vmul.f32 %v1532, %v1535
    %v1538 = vmul.f32 %v1506, %v1327
    %v1539 = vadd.f32 %v1537, %v1538
    %v1541 = vlaneseq
    %v1542 = vshrl.u32 %v1541, 7
    %v1543 = vsub.s32 0, %v1542
    %v1544 = vrot.slane %v1539, %v1543
    %1545 = vrot.lane.b32.xlu0 %v1544, 96
    %v1546 = vpop.permute.xlu0 %1545
    %s1548 = scalar_lea.vmem %s6, 6
    %1549 = vst.msk [vmem:[%s1548] sm:$0x1] %vm276, %v1546
    %v1550 = vsel %vm63, %v1546, 0
    %1552 = vmatprep.subr.mxu0 0.0
    %1553 = vmatpush1.msra.mxu0 0.0
    %1554 = vmatprep.subr.mxu0 0.0
    %1555 = vmatpush1.msra.mxu0 0.0
    %1556 = vmatprep.subr.mxu0 0.0
    %1557 = vmatpush1.msra.mxu0 0.0
    %1558 = vmatprep.subr.mxu0 0.0
    %1559 = vmatpush1.msra.mxu0 0.0
    %1560 = vmatprep.subr.mxu0 0.0
    %1561 = vmatpush1.msra.mxu0 0.0
    %1562 = vmatprep.subr.mxu0 0.0
    %1563 = vmatpush1.msra.mxu0 0.0
    %1564 = vmatprep.subr.mxu0 0.0
    %1565 = vmatpush1.msra.mxu0 0.0
    %1566 = vmatprep.subr.mxu0 0.0
    %1567 = vmatpush1.msra.mxu0 0.0
    %1568 = vmatprep.subr.mxu0 0.0
    %1569 = vmatpush1.msra.mxu0 0.0
    %1570 = vmatprep.subr.mxu0 0.0
    %1571 = vmatpush1.msra.mxu0 0.0
    %1572 = vmatprep.subr.mxu0 0.0
    %1573 = vmatpush1.msra.mxu0 0.0
    %1574 = vmatprep.subr.mxu0 0.0
    %1575 = vmatpush1.msra.mxu0 0.0
    %1576 = vmatprep.subr.mxu0 %v33
    %1577 = vmatpush1.msra.mxu0 %v32
    %1578 = vmatprep.subr.mxu0 %v31
    %1579 = vmatpush1.msra.mxu0 %v30
    %1580 = vmatprep.subr.mxu0 %v29
    %1581 = vmatpush1.msra.mxu0 %v28
    %1582 = vmatprep.subr.mxu0 %v27
    %1583 = vmatpush1.msra.mxu0 %v26
    %1584 = vmatprep.subr.mxu0 0.0
    %1585 = vmatpush2.msra.mxu0 0.0
    %1586 = vmatprep.subr.mxu0 0.0
    %1587 = vmatpush2.msra.mxu0 0.0
    %1588 = vmatprep.subr.mxu0 0.0
    %1589 = vmatpush2.msra.mxu0 0.0
    %1590 = vmatprep.subr.mxu0 0.0
    %1591 = vmatpush2.msra.mxu0 0.0
    %1592 = vmatprep.subr.mxu0 0.0
    %1593 = vmatpush2.msra.mxu0 0.0
    %1594 = vmatprep.subr.mxu0 0.0
    %1595 = vmatpush2.msra.mxu0 0.0
    %1596 = vmatprep.subr.mxu0 0.0
    %1597 = vmatpush2.msra.mxu0 0.0
    %1598 = vmatprep.subr.mxu0 0.0
    %1599 = vmatpush2.msra.mxu0 0.0
    %1600 = vmatprep.subr.mxu0 0.0
    %1601 = vmatpush2.msra.mxu0 0.0
    %1602 = vmatprep.subr.mxu0 0.0
    %1603 = vmatpush2.msra.mxu0 0.0
    %1604 = vmatprep.subr.mxu0 0.0
    %1605 = vmatpush2.msra.mxu0 0.0
    %1606 = vmatprep.subr.mxu0 0.0
    %1607 = vmatpush2.msra.mxu0 0.0
    %1608 = vmatprep.subr.mxu0 0.0
    %1609 = vmatpush2.msra.mxu0 0.0
    %1610 = vmatprep.subr.mxu0 0.0
    %1611 = vmatpush2.msra.mxu0 0.0
    %1612 = vmatprep.subr.mxu0 0.0
    %1613 = vmatpush2.msra.mxu0 0.0
    %1614 = vmatprep.subr.mxu0 0.0
    %1615 = vmatpush2.msra.mxu0 0.0
    %1616 = vmatprep.mubr.f32.mxu0 0.0
    %1617 = vmatmul.mubr.f32.gmra.mxu0 %v1550
    %v1618 = vpop.f32.mrf.mxu0
    %v1619 = vadd.f32 %v56, %v1618
    %v1620 = vpop.f32.mrf.mxu0
    %v1621 = vadd.f32 %v60, %v1620
    %1622 = vdwg.mxu0
    %s1623 = scalar_lea.vmem %s1, 7
    %v1624 = vld [vmem:[%s1623] sm:$0x1]
    %v1625 = vadd.f32 %v1624, %v1619
    %v1626 = vsel %vm140, %v1625, -inf
    %1627 = vmax.xlane.f32.xlu0 %v1626
    %v1628 = vpop.xlane.xlu0 %1627
    %v1629 = vsub.f32 %v1625, %v1628
    %v1630 = vmul.f32 %v1629, 1.442695
    %v1631 = vpow.pop %v1630
    %v1632 = vsel %vm140, %v1631, 0.0
    %1633 = vadd.xlane.f32.xlu0 %v1632
    %v1634 = vpop.xlane.xlu0 %1633
    %v1635 = vrcp.pop %v1634
    %v1636 = vmul.f32 %v1631, %v1635
    %s1637 = scalar_lea.vmem [#allocation2], 7
    %1638 = vst [vmem:[%s1637] sm:$0x1] %v1636
    %s1639 = scalar_lea.vmem %s2, 7
    %v1640 = vld [vmem:[%s1639] sm:$0x1]
    %1641 = vmatprep.subr.mxu0 0.0
    %1642 = vmatpush1.msra.mxu0 %v50
    %1643 = vmatprep.subr.mxu0 0.0
    %1644 = vmatpush1.msra.mxu0 %v49
    %1645 = vmatprep.subr.mxu0 0.0
    %1646 = vmatpush1.msra.mxu0 %v48
    %1647 = vmatprep.subr.mxu0 0.0
    %1648 = vmatpush1.msra.mxu0 %v47
    %1649 = vmatprep.subr.mxu0 0.0
    %1650 = vmatpush1.msra.mxu0 %v46
    %1651 = vmatprep.subr.mxu0 0.0
    %1652 = vmatpush1.msra.mxu0 %v45
    %1653 = vmatprep.subr.mxu0 0.0
    %1654 = vmatpush1.msra.mxu0 %v44
    %1655 = vmatprep.subr.mxu0 0.0
    %1656 = vmatpush1.msra.mxu0 %v43
    %1657 = vmatprep.subr.mxu0 0.0
    %1658 = vmatpush1.msra.mxu0 %v42
    %1659 = vmatprep.subr.mxu0 0.0
    %1660 = vmatpush1.msra.mxu0 %v41
    %1661 = vmatprep.subr.mxu0 0.0
    %1662 = vmatpush1.msra.mxu0 %v40
    %1663 = vmatprep.subr.mxu0 0.0
    %1664 = vmatpush1.msra.mxu0 %v39
    %1665 = vmatprep.subr.mxu0 0.0
    %1666 = vmatpush1.msra.mxu0 %v38
    %1667 = vmatprep.subr.mxu0 0.0
    %1668 = vmatpush1.msra.mxu0 %v37
    %1669 = vmatprep.subr.mxu0 0.0
    %1670 = vmatpush1.msra.mxu0 %v36
    %1671 = vmatprep.subr.mxu0 0.0
    %1672 = vmatpush1.msra.mxu0 %v35
    %1673 = vmatprep.subr.mxu0 0.0
    %1674 = vmatpush2.msra.mxu0 0.0
    %1675 = vmatprep.subr.mxu0 0.0
    %1676 = vmatpush2.msra.mxu0 0.0
    %1677 = vmatprep.subr.mxu0 0.0
    %1678 = vmatpush2.msra.mxu0 0.0
    %1679 = vmatprep.subr.mxu0 0.0
    %1680 = vmatpush2.msra.mxu0 0.0
    %1681 = vmatprep.subr.mxu0 0.0
    %1682 = vmatpush2.msra.mxu0 0.0
    %1683 = vmatprep.subr.mxu0 0.0
    %1684 = vmatpush2.msra.mxu0 0.0
    %1685 = vmatprep.subr.mxu0 0.0
    %1686 = vmatpush2.msra.mxu0 0.0
    %1687 = vmatprep.subr.mxu0 0.0
    %1688 = vmatpush2.msra.mxu0 0.0
    %1689 = vmatprep.subr.mxu0 0.0
    %1690 = vmatpush2.msra.mxu0 0.0
    %1691 = vmatprep.subr.mxu0 0.0
    %1692 = vmatpush2.msra.mxu0 0.0
    %1693 = vmatprep.subr.mxu0 0.0
    %1694 = vmatpush2.msra.mxu0 0.0
    %1695 = vmatprep.subr.mxu0 0.0
    %1696 = vmatpush2.msra.mxu0 0.0
    %1697 = vmatprep.subr.mxu0 0.0
    %1698 = vmatpush2.msra.mxu0 0.0
    %1699 = vmatprep.subr.mxu0 0.0
    %1700 = vmatpush2.msra.mxu0 0.0
    %1701 = vmatprep.subr.mxu0 0.0
    %1702 = vmatpush2.msra.mxu0 0.0
    %1703 = vmatprep.subr.mxu0 0.0
    %1704 = vmatpush2.msra.mxu0 0.0
    %1705 = vmatprep.mubr.f32.mxu0 0.0
    %1706 = vmatmul.mubr.f32.gmra.mxu0 %v1636
    %v1707 = vpop.f32.mrf.mxu0
    %v1708 = vadd.f32 0.0, %v1707
    %v1709 = vpop.f32.mrf.mxu0
    %1710 = vdwg.mxu0
    %v1711 = vadd.f32 %v1640, %v1708
    %v1712 = vadd.f32 %v1711, %v1621
    %v1713 = vxor.u32 %v1712, 2147483648
    %v1714 = vmul.f32 %v1713, 1.442695
    %v1715 = vpow.pop %v1714
    %v1716 = vadd.f32 %v1715, 1.0
    %v1717 = vrcp.pop %v1716
    %v1718 = vmul.f32 1.0, %v1717
    %v1721 = vunpack.c.l.s4 1966171168
    %v1722 = vunpack.c.0.s8 %v1721
    %v1723 = vlaneseq
    %v1724 = vshrl.u32 %v1723, 7
    %v1725 = vsub.s32 %v1722, %v1724
    %v1726 = vrot.slane %v1621, %v1725
    %v1728 = vunpack.c.l.s4 1966171168
    %v1729 = vunpack.c.0.s8 %v1728
    %v1730 = vlaneseq
    %v1731 = vshrl.u32 %v1730, 7
    %v1732 = vsub.s32 %v1729, %v1731
    %v1733 = vrot.slane %v1726, %v1732
    %1734 = vrot.lane.b32.xlu0 %v1733, 64
    %v1735 = vpop.permute.xlu0 %1734
    %v1737 = vmul.f32 %v1718, %v1735
    %1739 = vrot.lane.b32.xlu0 %v1737, 64
    %v1740 = vpop.permute.xlu0 %1739
    %v1742 = vadd.f32 %v1711, %v1740
    %v1743 = vtanh.pop %v1742
    %v1744 = vsub.f32 1.0, %v1718
    %1746 = vrot.lane.b32.xlu0 %v1743, 96
    %v1747 = vpop.permute.xlu0 %1746
    %v1749 = vmul.f32 %v1744, %v1747
    %v1750 = vmul.f32 %v1718, %v1539
    %v1751 = vadd.f32 %v1749, %v1750
    %v1753 = vlaneseq
    %v1754 = vshrl.u32 %v1753, 7
    %v1755 = vsub.s32 0, %v1754
    %v1756 = vrot.slane %v1751, %v1755
    %1757 = vrot.lane.b32.xlu0 %v1756, 96
    %v1758 = vpop.permute.xlu0 %1757
    %s1760 = scalar_lea.vmem %s6, 7
    %1761 = vst.msk [vmem:[%s1760] sm:$0x1] %vm276, %v1758
    // Predicated region
    $region26: #{attn_decoder_forward.1} parent=1 // pred_check
      _
    $region27: #{attn_decoder_forward.1} parent=1 // pred_check_branch
      %1763 = sbr.rel (0) target = $region29
    $region28: #{attn_decoder_forward.1} parent=1 // pred_region
      _
    $region29: #{attn_decoder_forward.1} parent=1 // pred_fallthru
      _
    // Predicated region
    $region30: #{attn_decoder_forward.1} parent=1 // pred_check
      _
    $region31: #{attn_decoder_forward.1} parent=1 // pred_check_branch
      %1765 = sbr.rel (0) target = $region33
    $region32: #{attn_decoder_forward.1} parent=1 // pred_region
      %s1767 = ssub.s32 128, 128
      %1768 = vsyncadd [#allocation3], %s1767
      %s1769 = sshll.u32 [#allocation2], 4
      %s1770 = int_to_ptr.vmem [resolvable:$true] %s1769
      %1775 = dma.vmem_to_hbm [thread:$0]  %s1770, 128, %s7, [#allocation3], 16, 16, 1
    $region33: #{attn_decoder_forward.1} parent=1 // pred_fallthru
      _
    // Predicated region
    $region34: #{attn_decoder_forward.1} parent=1 // pred_check
      _
    $region35: #{attn_decoder_forward.1} parent=1 // pred_check_branch
      %1777 = sbr.rel (0) target = $region37
    $region36: #{attn_decoder_forward.1} parent=1 // pred_region
      _
    $region37: #{attn_decoder_forward.1} parent=1 // pred_fallthru
      _
    // Predicated region
    $region38: #{attn_decoder_forward.1} parent=1 // pred_check
      _
    $region39: #{attn_decoder_forward.1} parent=1 // pred_check_branch
      %1779 = sbr.rel (0) target = $region41
    $region40: #{attn_decoder_forward.1} parent=1 // pred_region
      %1780 = dma.done [#allocation3], 128
    $region41: #{attn_decoder_forward.1} parent=1 // pred_fallthru
      _
    %1781 = vsyncpa [#allocation3], 1

</llo_original>
